<compile_context>
chip_gen: v7x
topology: tpu7x:2x2x1
jax: 0.10.0
libtpu: 0.0.40
codegen_flags: <defaults>
</compile_context>

<pallas_src>
import functools

import jax
import jax.numpy as jnp
from jax.experimental import pallas as pl
from jax.experimental.pallas import tpu as pltpu


# --------------------------------------------------------------------------- #
# Kernel                                                                       #
# --------------------------------------------------------------------------- #
def _build_kernel(*, k, wp, wo, wp_eff, nc_b, mode, inv_denom, need_pooled):
    """Build the per-level kernel with an explicit ref signature."""

    def body(t_ref, inp_ref, sel_ref, part_ref, pooled_ref, acc_ref):
        j = pl.program_id(1)

        @pl.when(j == 0)
        def _init():
            acc_ref[...] = jnp.zeros(acc_ref.shape, acc_ref.dtype)

        if k > 1:
            sel = sel_ref[...]                      # (wp_eff, wo) bf16, once / step

        for b in range(nc_b):                       # static unroll over folded (n,c)
            t = t_ref[b]                            # (ho_c, k*wp)

            # H-axis max pool: the k row offsets are contiguous wp-wide lane groups.
            hp = t[:, 0:wp]
            for r in range(1, k):
                hp = jnp.maximum(hp, t[:, r * wp:(r + 1) * wp])

            if k == 1:
                pooled = hp
            else:
                # W-axis max BEFORE compaction: k-1 shifted-slice maxima (VPU/XLU),
                # then one lane compaction on the MXU with a (wp_eff, wo) 0/1 matrix.
                wmax = hp[:, 0:wp_eff]
                for s in range(1, k):
                    wmax = jnp.maximum(wmax, hp[:, s:s + wp_eff])
                # Exact-zero-preserving hi/residual split; both dots single-pass bf16.
                # TODO(synk): a mantissa-mask truncation (bitcast & 0xFFFF0000) would
                # save one convert on v5e's bf16-less VPU.
                hi_bf = wmax.astype(jnp.bfloat16)
                lo_bf = (wmax - hi_bf.astype(jnp.float32)).astype(jnp.bfloat16)
                pooled = (
                    jnp.dot(hi_bf, sel, preferred_element_type=jnp.float32)
                    + jnp.dot(lo_bf, sel, preferred_element_type=jnp.float32))

            if need_pooled:
                pooled_ref[b] = pooled              # feeds the next pyramid level

            # sparse mask (input_[target_ == 0] = 0) and residual.
            diff = jnp.where(pooled == 0.0, 0.0, pooled - inp_ref[b])
            contrib = diff * diff if mode == 'epe' else jnp.abs(diff)
            # element-wise accumulation over H chunks: no per-step reduction at all.
            acc_ref[b] = acc_ref[b] + contrib

        @pl.when(j == pl.num_programs(1) - 1)
        def _finalize():
            total = jnp.float32(0.0)
            for b in range(nc_b):
                col = jnp.sum(acc_ref[b], axis=0, keepdims=True)     # (1, wo)
                if mode == 'epe':
                    col = jnp.sqrt(col)                              # EUP
                total = total + jnp.sum(col)
            part_ref[...] = jnp.zeros((1, 128), jnp.float32) + total * inv_denom

    if k > 1 and need_pooled:
        def kernel(t_ref, inp_ref, sel_ref, part_ref, pooled_ref, acc_ref):
            body(t_ref, inp_ref, sel_ref, part_ref, pooled_ref, acc_ref)
    elif k > 1:
        def kernel(t_ref, inp_ref, sel_ref, part_ref, acc_ref):
            body(t_ref, inp_ref, sel_ref, part_ref, None, acc_ref)
    elif need_pooled:
        def kernel(t_ref, inp_ref, part_ref, pooled_ref, acc_ref):
            body(t_ref, inp_ref, None, part_ref, pooled_ref, acc_ref)
    else:
        def kernel(t_ref, inp_ref, part_ref, acc_ref):
            body(t_ref, inp_ref, None, part_ref, None, acc_ref)
    return kernel


# --------------------------------------------------------------------------- #
# Tiling                                                                       #
# --------------------------------------------------------------------------- #
def _vmem_capacity_bytes():
    try:
        info = pltpu.get_tpu_info()
        for attr in ("vmem_capacity_bytes", "vmem_capacity", "vmem_bytes"):
            v = getattr(info, attr, None)
            if v:
                return int(v)
    except Exception:
        pass
    return 64 * 1024 * 1024           # conservative default (v7x per-TC VMEM)


def _choose_tiling(nc, ho, per_row_bytes, budget_bytes, max_fold=8):
    """Pick (nc_b, ho_c).  Small levels: fold several (n,c) slices per grid step
    (amortizes the ~0.35us fixed per-step cost).  Big levels: chunk H under the
    per-step VMEM budget."""
    slice_bytes = ho * per_row_bytes
    if slice_bytes <= budget_bytes:
        nc_b = 1
        limit = min(max_fold, max(1, nc // 2))     # keep >=2 parallel steps for megacore
        for cand in range(1, limit + 1):
            if nc % cand == 0 and cand * slice_bytes <= budget_bytes:
                nc_b = cand
        return nc_b, ho
    if ho % 8 == 0:
        best = 8
        for cand in range(8, ho + 1, 8):
            if ho % cand == 0 and cand * per_row_bytes <= budget_bytes:
                best = cand
        return 1, best
    # ho not a multiple of 8: take the largest divisor under the budget instead of
    # unconditionally falling back to the full (possibly oversized) extent.
    best = ho
    for cand in range(1, ho):
        if ho % cand == 0 and cand * per_row_bytes <= budget_bytes:
            best = cand
    return 1, best


# --------------------------------------------------------------------------- #
# One pyramid level                                                            #
# --------------------------------------------------------------------------- #
def _scale_pass(target3, inp3, k, *, mode, need_pooled, budget_bytes=None):
    """target3: (NC, Hp, Wp) target pooled so far; inp3: (NC, Hp//k, Wp//k).
    Returns (level_loss, pooled (NC, Ho, Wo) or None)."""
    nc, hp_, wp = target3.shape
    assert hp_ % k == 0 and wp % k == 0, "spatial dims must divide the pooling window"
    ho, wo = hp_ // k, wp // k
    assert inp3.shape == (nc, ho, wo), (inp3.shape, (nc, ho, wo))

    capacity = _vmem_capacity_bytes()
    if budget_bytes is None:
        budget_bytes = max(2 << 20, min(8 << 20, capacity // 8))

    # bytes per output row per (n,c) slice: double-buffered tgt/inp(/pooled) + acc.
    per_row = 8 * k * wp + 12 * wo + (8 * wo if need_pooled else 0)
    nc_b, ho_c = _choose_tiling(nc, ho, per_row, budget_bytes)
    num_i, num_j = nc // nc_b, ho // ho_c

    tgt = target3.reshape(nc, ho, k * wp)          # free row-major view, no transpose

    wp_eff = wp - (k - 1)
    inputs = [tgt, inp3]
    in_specs = [
        pl.BlockSpec((nc_b, ho_c, k * wp), lambda i, j: (i, j, 0)),
        pl.BlockSpec((nc_b, ho_c, wo), lambda i, j: (i, j, 0)),
    ]
    sel_bytes = 0
    if k > 1:
        # bf16 0/1 lane-compaction matrix: column w selects lane w*k of the W-maxed rows.
        sel = (jnp.arange(wp_eff, dtype=jnp.int32)[:, None]
               == (k * jnp.arange(wo, dtype=jnp.int32))[None, :]).astype(jnp.bfloat16)
        inputs.append(sel)
        # Constant index_map => Pallas never re-DMAs it across grid steps.
        # TODO(synk): for very wide Wp (>~2k) add a W grid axis (+ pl.Buffered(1) on
        # sel) so sel and its double buffer stay bounded on v7x's 64 MiB VMEM.
        in_specs.append(pl.BlockSpec((wp_eff, wo), lambda i, j: (0, 0)))
        sel_bytes = wp_eff * wo * 2

    out_specs = [pl.BlockSpec((None, 1, 128), lambda i, j: (i, 0, 0))]
    out_shape = [jax.ShapeDtypeStruct((num_i, 1, 128), jnp.float32)]
    if need_pooled:
        out_specs.append(pl.BlockSpec((nc_b, ho_c, wo), lambda i, j: (i, j, 0)))
        out_shape.append(jax.ShapeDtypeStruct((nc, ho, wo), jnp.float32))

    denom = nc * wo if mode == 'epe' else nc * ho * wo
    kernel = _build_kernel(k=k, wp=wp, wo=wo, wp_eff=wp_eff, nc_b=nc_b, mode=mode,
                           inv_denom=1.0 / float(denom), need_pooled=need_pooled)

    # Explicit scoped-VMEM limit: cover the double-buffered blocks + sel + headroom,
    # without exceeding this generation's physical VMEM.
    working = nc_b * ho_c * per_row + 2 * sel_bytes + 2 * 128 * 4
    vmem_limit = max(working + (16 << 20), 32 << 20)
    vmem_limit = min(vmem_limit, int(capacity * 0.85))
    vmem_limit = max(vmem_limit, working + (4 << 20))

    results = pl.pallas_call(
        kernel,
        grid=(num_i, num_j),
        in_specs=in_specs,
        out_specs=tuple(out_specs),
        out_shape=tuple(out_shape),
        scratch_shapes=[pltpu.VMEM((nc_b, ho_c, wo), jnp.float32)],
        compiler_params=pltpu.CompilerParams(
            dimension_semantics=("parallel", "arbitrary"),
            vmem_limit_bytes=int(vmem_limit)),
    )(*inputs)

    parts = results[0]
    pooled = results[1] if need_pooled else None
    return jnp.sum(parts[:, 0, 0]), pooled


# --------------------------------------------------------------------------- #
# Public entry point (forward pass of MultiScaleLossSparse)                    #
# --------------------------------------------------------------------------- #
def multi_scale_loss_sparse(inputs, target, *, scales, downscale,
                            weights=None, loss='L1', budget_bytes=None):
    assert loss == 'L1'  # TODO(synk): MSE / SmoothL1 reductions not implemented.
    if weights is None:
        weights = [1.0] * scales
    assert len(weights) == scales

    n, c, h, w = target.shape
    tgt = target.reshape(n * c, h, w).astype(jnp.float32)

    if isinstance(inputs, tuple):
        assert len(inputs) <= scales
        k_last = downscale * 2 ** (len(inputs) - 1)
        assert h % k_last == 0 and w % k_last == 0, (
            "H and W must be divisible by every pooling window (MaxPool2d semantics)")
        out = jnp.float32(0.0)
        cur, cur_k = tgt, downscale               # hierarchical max-pool across levels
        for i, inp in enumerate(inputs):
            ni, ci, hi, wi = inp.shape
            inp3 = inp.reshape(ni * ci, hi, wi).astype(jnp.float32)
            need_pooled = (i + 1) < len(inputs)   # last level never feeds anything
            level_loss, pooled = _scale_pass(cur, inp3, cur_k, mode='epe',
                                             need_pooled=need_pooled,
                                             budget_bytes=budget_bytes)
            out = out + jnp.float32(weights[i]) * level_loss
            if need_pooled:
                cur, cur_k = pooled, 2            # maxpool_{2k} = maxpool_2 o maxpool_k
        return out
    else:
        k = downscale
        assert h % k == 0 and w % k == 0
        ni, ci, hi, wi = inputs.shape
        inp3 = inputs.reshape(ni * ci, hi, wi).astype(jnp.float32)
        level_loss, _ = _scale_pass(tgt, inp3, k, mode='l1', need_pooled=False,
                                    budget_bytes=budget_bytes)
        return level_loss


# --------------------------------------------------------------------------- #
# Pure-JAX reference (replicates the PyTorch forward, tuple branch)            #
# --------------------------------------------------------------------------- #
def _reference(inputs, target, downscale, weights):
    out = 0.0
    for i, inp in enumerate(inputs):
        k = downscale * 2 ** i
        n, c, h, w = target.shape
        t = target.reshape(n, c, h // k, k, w // k, k).max(axis=(3, 5))
        inp_m = jnp.where(t == 0.0, 0.0, inp)
        epe = jnp.sqrt(jnp.sum((t - inp_m) ** 2, axis=2))   # norm over dim 2 (H)
        out = out + weights[i] * jnp.mean(jnp.abs(epe))
    return out


if __name__ == "__main__":
    key = jax.random.PRNGKey(0)
    kt, km, k0, k1, k2, kt2, km2, k3, k4 = jax.random.split(key, 9)

    downscale, scales = 2, 2
    weights = [0.32, 0.08]

    # --- Case 1: tuple branch, nc-folded path (whole level per grid step). -------
    N, C, H, W = 2, 4, 16, 16
    dense = jnp.abs(jax.random.normal(kt, (N, C, H, W), jnp.float32))
    zero_mask = jax.random.uniform(km, (N, C, H, W)) < 0.6     # ~60% exact zeros
    target = jnp.where(zero_mask, 0.0, dense)
    inputs = (
        jax.random.normal(k0, (N, C, H // 2, W // 2), jnp.float32),
        jax.random.normal(k1, (N, C, H // 4, W // 4), jnp.float32),
    )
    out = multi_scale_loss_sparse(inputs, target, scales=scales, downscale=downscale,
                                  weights=weights, loss='L1')
    out = jax.block_until_ready(out)
    ref = _reference(inputs, target, downscale, weights)
    assert jnp.allclose(out, ref, rtol=1e-4, atol=1e-5), (float(out), float(ref))

    # --- Case 2: tuple branch, H-chunked path (forced tiny VMEM budget). ---------
    N2, C2, H2, W2 = 2, 2, 32, 32
    dense2 = jnp.abs(jax.random.normal(kt2, (N2, C2, H2, W2), jnp.float32))
    zmask2 = jax.random.uniform(km2, (N2, C2, H2, W2)) < 0.6
    target2 = jnp.where(zmask2, 0.0, dense2)
    inputs2 = (
        jax.random.normal(k3, (N2, C2, H2 // 2, W2 // 2), jnp.float32),
        jax.random.normal(k4, (N2, C2, H2 // 4, W2 // 4), jnp.float32),
    )
    out2 = multi_scale_loss_sparse(inputs2, target2, scales=scales,
                                   downscale=downscale, weights=weights, loss='L1',
                                   budget_bytes=7 * 1024)
    out2 = jax.block_until_ready(out2)
    ref2 = _reference(inputs2, target2, downscale, weights)
    assert jnp.allclose(out2, ref2, rtol=1e-4, atol=1e-5), (float(out2), float(ref2))

    # --- Case 3: non-tuple branch (masked L1 against the max-pooled target). -----
    single = jax.random.normal(k2, (N, C, H // 2, W // 2), jnp.float32)
    out_s = multi_scale_loss_sparse(single, target, scales=scales,
                                    downscale=downscale, weights=weights, loss='L1')
    out_s = jax.block_until_ready(out_s)
    t0 = target.reshape(N, C, H // 2, 2, W // 2, 2).max(axis=(3, 5))
    ref_s = jnp.mean(jnp.abs(jnp.where(t0 == 0.0, 0.0, single) - t0))
    assert jnp.allclose(out_s, ref_s, rtol=1e-4, atol=1e-5), (float(out_s), float(ref_s))

    print("KERNEL_OK")
</pallas_src>

<mosaic_0001>
module attributes {stable_mosaic.version = 11 : i64} {
  func.func @kernel(%arg0: i32, %arg1: i32, %arg2: memref<4x8x32xf32, #tpu.memory_space<vmem>>, %arg3: memref<4x8x8xf32, #tpu.memory_space<vmem>>, %arg4: memref<15x8xbf16, #tpu.memory_space<vmem>>, %arg5: memref<1x1x128xf32, #tpu.memory_space<vmem>>, %arg6: memref<4x8x8xf32, #tpu.memory_space<vmem>>, %arg7: memref<4x8x8xf32, #tpu.memory_space<vmem>>) attributes {dimension_semantics = [#tpu.dimension_semantics<parallel>, #tpu.dimension_semantics<arbitrary>], iteration_bounds = array<i64: 2, 1>, scalar_prefetch = 0 : i64, scratch_operands = 1 : i64, tpu.core_type = #tpu.core_type<tc>, window_params = [{transform_indices = @transform_0, window_bounds = array<i64: 4, 8, 32>}, {transform_indices = @transform_1, window_bounds = array<i64: 4, 8, 8>}, {pipeline_mode = #tpu.pipeline_mode<synchronous>, transform_indices = @transform_2, window_bounds = array<i64: 15, 8>}, {transform_indices = @transform_3, window_bounds = array<i64: 1, 1, 128>}, {transform_indices = @transform_4, window_bounds = array<i64: 4, 8, 8>}]} {
    %c0_i32 = arith.constant 0 : i32
    %0 = arith.cmpi eq, %arg1, %c0_i32 : i32
    %1 = arith.extui %0 : i1 to i32
    %c0_i32_0 = arith.constant 0 : i32
    %2 = arith.cmpi ne, %1, %c0_i32_0 : i32
    scf.if %2 {
      %cst_76 = arith.constant 0.000000e+00 : f32
      %135 = vector.broadcast %cst_76 : f32 to vector<4x8x8xf32>
      %c0_77 = arith.constant 0 : index
      %c0_78 = arith.constant 0 : index
      %c0_79 = arith.constant 0 : index
      %136 = vector.load %arg7[%c0_77, %c0_78, %c0_79] : memref<4x8x8xf32, #tpu.memory_space<vmem>>, vector<4x8x8xf32>
      tpu.vector_store %arg7[%c0_77, %c0_78, %c0_79], %135 {strides = array<i32>} : memref<4x8x8xf32, #tpu.memory_space<vmem>>, vector<4x8x8xf32>,
    } else {
    }
    %c0 = arith.constant 0 : index
    %c0_1 = arith.constant 0 : index
    %3 = vector.load %arg4[%c0, %c0_1] : memref<15x8xbf16, #tpu.memory_space<vmem>>, vector<15x8xbf16>
    %c0_2 = arith.constant 0 : index
    %c0_3 = arith.constant 0 : index
    %c0_4 = arith.constant 0 : index
    %4 = vector.load %arg2[%c0_2, %c0_3, %c0_4] : memref<4x8x32xf32, #tpu.memory_space<vmem>>, vector<1x8x32xf32>
    %5 = vector.shape_cast %4 : vector<1x8x32xf32> to vector<8x32xf32>
    %6 = vector.extract_strided_slice %5 {offsets = [0, 0], sizes = [8, 16], strides = [1, 1]} : vector<8x32xf32> to vector<8x16xf32>
    %7 = vector.extract_strided_slice %5 {offsets = [0, 16], sizes = [8, 16], strides = [1, 1]} : vector<8x32xf32> to vector<8x16xf32>
    %8 = arith.maximumf %6, %7 : vector<8x16xf32>
    %9 = vector.extract_strided_slice %8 {offsets = [0, 0], sizes = [8, 15], strides = [1, 1]} : vector<8x16xf32> to vector<8x15xf32>
    %10 = vector.extract_strided_slice %8 {offsets = [0, 1], sizes = [8, 15], strides = [1, 1]} : vector<8x16xf32> to vector<8x15xf32>
    %11 = arith.maximumf %9, %10 : vector<8x15xf32>
    %12 = arith.truncf %11 : vector<8x15xf32> to vector<8x15xbf16>
    %13 = arith.extf %12 : vector<8x15xbf16> to vector<8x15xf32>
    %14 = arith.subf %11, %13 : vector<8x15xf32>
    %15 = arith.truncf %14 : vector<8x15xf32> to vector<8x15xbf16>
    %cst = arith.constant dense<0.000000e+00> : vector<8x8xf32>
    %16 = tpu.matmul %12, %3, %cst {dimension_numbers = #tpu.dot_dimension_numbers<[1], [0], [0], [1], [0, 0, 1, 1], [], []>} : vector<8x15xbf16>, vector<15x8xbf16>, vector<8x8xf32> -> vector<8x8xf32>
    %cst_5 = arith.constant dense<0.000000e+00> : vector<8x8xf32>
    %17 = tpu.matmul %15, %3, %cst_5 {dimension_numbers = #tpu.dot_dimension_numbers<[1], [0], [0], [1], [0, 0, 1, 1], [], []>} : vector<8x15xbf16>, vector<15x8xbf16>, vector<8x8xf32> -> vector<8x8xf32>
    %18 = arith.addf %16, %17 : vector<8x8xf32>
    %c0_6 = arith.constant 0 : index
    %c0_7 = arith.constant 0 : index
    %c0_8 = arith.constant 0 : index
    %19 = vector.load %arg6[%c0_6, %c0_7, %c0_8] : memref<4x8x8xf32, #tpu.memory_space<vmem>>, vector<1x8x8xf32>
    %20 = vector.shape_cast %19 : vector<1x8x8xf32> to vector<8x8xf32>
    %21 = vector.shape_cast %18 : vector<8x8xf32> to vector<1x8x8xf32>
    tpu.vector_store %arg6[%c0_6, %c0_7, %c0_8], %21 {strides = array<i32>} : memref<4x8x8xf32, #tpu.memory_space<vmem>>, vector<1x8x8xf32>,
    %cst_9 = arith.constant 0.000000e+00 : f32
    %22 = vector.broadcast %cst_9 : f32 to vector<8x8xf32>
    %23 = arith.cmpf oeq, %18, %22 : vector<8x8xf32>
    %c0_10 = arith.constant 0 : index
    %c0_11 = arith.constant 0 : index
    %c0_12 = arith.constant 0 : index
    %24 = vector.load %arg3[%c0_10, %c0_11, %c0_12] : memref<4x8x8xf32, #tpu.memory_space<vmem>>, vector<1x8x8xf32>
    %25 = vector.shape_cast %24 : vector<1x8x8xf32> to vector<8x8xf32>
    %26 = arith.subf %18, %25 : vector<8x8xf32>
    %cst_13 = arith.constant 0.000000e+00 : f32
    %27 = vector.broadcast %cst_13 : f32 to vector<8x8xf32>
    %28 = arith.select %23, %27, %26 : vector<8x8xi1>, vector<8x8xf32>
    %29 = arith.mulf %28, %28 : vector<8x8xf32>
    %c0_14 = arith.constant 0 : index
    %c0_15 = arith.constant 0 : index
    %c0_16 = arith.constant 0 : index
    %30 = vector.load %arg7[%c0_14, %c0_15, %c0_16] : memref<4x8x8xf32, #tpu.memory_space<vmem>>, vector<1x8x8xf32>
    %31 = vector.shape_cast %30 : vector<1x8x8xf32> to vector<8x8xf32>
    %32 = arith.addf %31, %29 : vector<8x8xf32>
    %c0_17 = arith.constant 0 : index
    %c0_18 = arith.constant 0 : index
    %c0_19 = arith.constant 0 : index
    %33 = vector.load %arg7[%c0_17, %c0_18, %c0_19] : memref<4x8x8xf32, #tpu.memory_space<vmem>>, vector<1x8x8xf32>
    %34 = vector.shape_cast %33 : vector<1x8x8xf32> to vector<8x8xf32>
    %35 = vector.shape_cast %32 : vector<8x8xf32> to vector<1x8x8xf32>
    tpu.vector_store %arg7[%c0_17, %c0_18, %c0_19], %35 {strides = array<i32>} : memref<4x8x8xf32, #tpu.memory_space<vmem>>, vector<1x8x8xf32>,
    %c1 = arith.constant 1 : index
    %c0_20 = arith.constant 0 : index
    %c0_21 = arith.constant 0 : index
    %36 = vector.load %arg2[%c1, %c0_20, %c0_21] : memref<4x8x32xf32, #tpu.memory_space<vmem>>, vector<1x8x32xf32>
    %37 = vector.shape_cast %36 : vector<1x8x32xf32> to vector<8x32xf32>
    %38 = vector.extract_strided_slice %37 {offsets = [0, 0], sizes = [8, 16], strides = [1, 1]} : vector<8x32xf32> to vector<8x16xf32>
    %39 = vector.extract_strided_slice %37 {offsets = [0, 16], sizes = [8, 16], strides = [1, 1]} : vector<8x32xf32> to vector<8x16xf32>
    %40 = arith.maximumf %38, %39 : vector<8x16xf32>
    %41 = vector.extract_strided_slice %40 {offsets = [0, 0], sizes = [8, 15], strides = [1, 1]} : vector<8x16xf32> to vector<8x15xf32>
    %42 = vector.extract_strided_slice %40 {offsets = [0, 1], sizes = [8, 15], strides = [1, 1]} : vector<8x16xf32> to vector<8x15xf32>
    %43 = arith.maximumf %41, %42 : vector<8x15xf32>
    %44 = arith.truncf %43 : vector<8x15xf32> to vector<8x15xbf16>
    %45 = arith.extf %44 : vector<8x15xbf16> to vector<8x15xf32>
    %46 = arith.subf %43, %45 : vector<8x15xf32>
    %47 = arith.truncf %46 : vector<8x15xf32> to vector<8x15xbf16>
    %cst_22 = arith.constant dense<0.000000e+00> : vector<8x8xf32>
    %48 = tpu.matmul %44, %3, %cst_22 {dimension_numbers = #tpu.dot_dimension_numbers<[1], [0], [0], [1], [0, 0, 1, 1], [], []>} : vector<8x15xbf16>, vector<15x8xbf16>, vector<8x8xf32> -> vector<8x8xf32>
    %cst_23 = arith.constant dense<0.000000e+00> : vector<8x8xf32>
    %49 = tpu.matmul %47, %3, %cst_23 {dimension_numbers = #tpu.dot_dimension_numbers<[1], [0], [0], [1], [0, 0, 1, 1], [], []>} : vector<8x15xbf16>, vector<15x8xbf16>, vector<8x8xf32> -> vector<8x8xf32>
    %50 = arith.addf %48, %49 : vector<8x8xf32>
    %c1_24 = arith.constant 1 : index
    %c0_25 = arith.constant 0 : index
    %c0_26 = arith.constant 0 : index
    %51 = vector.load %arg6[%c1_24, %c0_25, %c0_26] : memref<4x8x8xf32, #tpu.memory_space<vmem>>, vector<1x8x8xf32>
    %52 = vector.shape_cast %51 : vector<1x8x8xf32> to vector<8x8xf32>
    %53 = vector.shape_cast %50 : vector<8x8xf32> to vector<1x8x8xf32>
    tpu.vector_store %arg6[%c1_24, %c0_25, %c0_26], %53 {strides = array<i32>} : memref<4x8x8xf32, #tpu.memory_space<vmem>>, vector<1x8x8xf32>,
    %cst_27 = arith.constant 0.000000e+00 : f32
    %54 = vector.broadcast %cst_27 : f32 to vector<8x8xf32>
    %55 = arith.cmpf oeq, %50, %54 : vector<8x8xf32>
    %c1_28 = arith.constant 1 : index
    %c0_29 = arith.constant 0 : index
    %c0_30 = arith.constant 0 : index
    %56 = vector.load %arg3[%c1_28, %c0_29, %c0_30] : memref<4x8x8xf32, #tpu.memory_space<vmem>>, vector<1x8x8xf32>
    %57 = vector.shape_cast %56 : vector<1x8x8xf32> to vector<8x8xf32>
    %58 = arith.subf %50, %57 : vector<8x8xf32>
    %cst_31 = arith.constant 0.000000e+00 : f32
    %59 = vector.broadcast %cst_31 : f32 to vector<8x8xf32>
    %60 = arith.select %55, %59, %58 : vector<8x8xi1>, vector<8x8xf32>
    %61 = arith.mulf %60, %60 : vector<8x8xf32>
    %c1_32 = arith.constant 1 : index
    %c0_33 = arith.constant 0 : index
    %c0_34 = arith.constant 0 : index
    %62 = vector.load %arg7[%c1_32, %c0_33, %c0_34] : memref<4x8x8xf32, #tpu.memory_space<vmem>>, vector<1x8x8xf32>
    %63 = vector.shape_cast %62 : vector<1x8x8xf32> to vector<8x8xf32>
    %64 = arith.addf %63, %61 : vector<8x8xf32>
    %c1_35 = arith.constant 1 : index
    %c0_36 = arith.constant 0 : index
    %c0_37 = arith.constant 0 : index
    %65 = vector.load %arg7[%c1_35, %c0_36, %c0_37] : memref<4x8x8xf32, #tpu.memory_space<vmem>>, vector<1x8x8xf32>
    %66 = vector.shape_cast %65 : vector<1x8x8xf32> to vector<8x8xf32>
    %67 = vector.shape_cast %64 : vector<8x8xf32> to vector<1x8x8xf32>
    tpu.vector_store %arg7[%c1_35, %c0_36, %c0_37], %67 {strides = array<i32>} : memref<4x8x8xf32, #tpu.memory_space<vmem>>, vector<1x8x8xf32>,
    %c2 = arith.constant 2 : index
    %c0_38 = arith.constant 0 : index
    %c0_39 = arith.constant 0 : index
    %68 = vector.load %arg2[%c2, %c0_38, %c0_39] : memref<4x8x32xf32, #tpu.memory_space<vmem>>, vector<1x8x32xf32>
    %69 = vector.shape_cast %68 : vector<1x8x32xf32> to vector<8x32xf32>
    %70 = vector.extract_strided_slice %69 {offsets = [0, 0], sizes = [8, 16], strides = [1, 1]} : vector<8x32xf32> to vector<8x16xf32>
    %71 = vector.extract_strided_slice %69 {offsets = [0, 16], sizes = [8, 16], strides = [1, 1]} : vector<8x32xf32> to vector<8x16xf32>
    %72 = arith.maximumf %70, %71 : vector<8x16xf32>
    %73 = vector.extract_strided_slice %72 {offsets = [0, 0], sizes = [8, 15], strides = [1, 1]} : vector<8x16xf32> to vector<8x15xf32>
    %74 = vector.extract_strided_slice %72 {offsets = [0, 1], sizes = [8, 15], strides = [1, 1]} : vector<8x16xf32> to vector<8x15xf32>
    %75 = arith.maximumf %73, %74 : vector<8x15xf32>
    %76 = arith.truncf %75 : vector<8x15xf32> to vector<8x15xbf16>
    %77 = arith.extf %76 : vector<8x15xbf16> to vector<8x15xf32>
    %78 = arith.subf %75, %77 : vector<8x15xf32>
    %79 = arith.truncf %78 : vector<8x15xf32> to vector<8x15xbf16>
    %cst_40 = arith.constant dense<0.000000e+00> : vector<8x8xf32>
    %80 = tpu.matmul %76, %3, %cst_40 {dimension_numbers = #tpu.dot_dimension_numbers<[1], [0], [0], [1], [0, 0, 1, 1], [], []>} : vector<8x15xbf16>, vector<15x8xbf16>, vector<8x8xf32> -> vector<8x8xf32>
    %cst_41 = arith.constant dense<0.000000e+00> : vector<8x8xf32>
    %81 = tpu.matmul %79, %3, %cst_41 {dimension_numbers = #tpu.dot_dimension_numbers<[1], [0], [0], [1], [0, 0, 1, 1], [], []>} : vector<8x15xbf16>, vector<15x8xbf16>, vector<8x8xf32> -> vector<8x8xf32>
    %82 = arith.addf %80, %81 : vector<8x8xf32>
    %c2_42 = arith.constant 2 : index
    %c0_43 = arith.constant 0 : index
    %c0_44 = arith.constant 0 : index
    %83 = vector.load %arg6[%c2_42, %c0_43, %c0_44] : memref<4x8x8xf32, #tpu.memory_space<vmem>>, vector<1x8x8xf32>
    %84 = vector.shape_cast %83 : vector<1x8x8xf32> to vector<8x8xf32>
    %85 = vector.shape_cast %82 : vector<8x8xf32> to vector<1x8x8xf32>
    tpu.vector_store %arg6[%c2_42, %c0_43, %c0_44], %85 {strides = array<i32>} : memref<4x8x8xf32, #tpu.memory_space<vmem>>, vector<1x8x8xf32>,
    %cst_45 = arith.constant 0.000000e+00 : f32
    %86 = vector.broadcast %cst_45 : f32 to vector<8x8xf32>
    %87 = arith.cmpf oeq, %82, %86 : vector<8x8xf32>
    %c2_46 = arith.constant 2 : index
    %c0_47 = arith.constant 0 : index
    %c0_48 = arith.constant 0 : index
    %88 = vector.load %arg3[%c2_46, %c0_47, %c0_48] : memref<4x8x8xf32, #tpu.memory_space<vmem>>, vector<1x8x8xf32>
    %89 = vector.shape_cast %88 : vector<1x8x8xf32> to vector<8x8xf32>
    %90 = arith.subf %82, %89 : vector<8x8xf32>
    %cst_49 = arith.constant 0.000000e+00 : f32
    %91 = vector.broadcast %cst_49 : f32 to vector<8x8xf32>
    %92 = arith.select %87, %91, %90 : vector<8x8xi1>, vector<8x8xf32>
    %93 = arith.mulf %92, %92 : vector<8x8xf32>
    %c2_50 = arith.constant 2 : index
    %c0_51 = arith.constant 0 : index
    %c0_52 = arith.constant 0 : index
    %94 = vector.load %arg7[%c2_50, %c0_51, %c0_52] : memref<4x8x8xf32, #tpu.memory_space<vmem>>, vector<1x8x8xf32>
    %95 = vector.shape_cast %94 : vector<1x8x8xf32> to vector<8x8xf32>
    %96 = arith.addf %95, %93 : vector<8x8xf32>
    %c2_53 = arith.constant 2 : index
    %c0_54 = arith.constant 0 : index
    %c0_55 = arith.constant 0 : index
    %97 = vector.load %arg7[%c2_53, %c0_54, %c0_55] : memref<4x8x8xf32, #tpu.memory_space<vmem>>, vector<1x8x8xf32>
    %98 = vector.shape_cast %97 : vector<1x8x8xf32> to vector<8x8xf32>
    %99 = vector.shape_cast %96 : vector<8x8xf32> to vector<1x8x8xf32>
    tpu.vector_store %arg7[%c2_53, %c0_54, %c0_55], %99 {strides = array<i32>} : memref<4x8x8xf32, #tpu.memory_space<vmem>>, vector<1x8x8xf32>,
    %c3 = arith.constant 3 : index
    %c0_56 = arith.constant 0 : index
    %c0_57 = arith.constant 0 : index
    %100 = vector.load %arg2[%c3, %c0_56, %c0_57] : memref<4x8x32xf32, #tpu.memory_space<vmem>>, vector<1x8x32xf32>
    %101 = vector.shape_cast %100 : vector<1x8x32xf32> to vector<8x32xf32>
    %102 = vector.extract_strided_slice %101 {offsets = [0, 0], sizes = [8, 16], strides = [1, 1]} : vector<8x32xf32> to vector<8x16xf32>
    %103 = vector.extract_strided_slice %101 {offsets = [0, 16], sizes = [8, 16], strides = [1, 1]} : vector<8x32xf32> to vector<8x16xf32>
    %104 = arith.maximumf %102, %103 : vector<8x16xf32>
    %105 = vector.extract_strided_slice %104 {offsets = [0, 0], sizes = [8, 15], strides = [1, 1]} : vector<8x16xf32> to vector<8x15xf32>
    %106 = vector.extract_strided_slice %104 {offsets = [0, 1], sizes = [8, 15], strides = [1, 1]} : vector<8x16xf32> to vector<8x15xf32>
    %107 = arith.maximumf %105, %106 : vector<8x15xf32>
    %108 = arith.truncf %107 : vector<8x15xf32> to vector<8x15xbf16>
    %109 = arith.extf %108 : vector<8x15xbf16> to vector<8x15xf32>
    %110 = arith.subf %107, %109 : vector<8x15xf32>
    %111 = arith.truncf %110 : vector<8x15xf32> to vector<8x15xbf16>
    %cst_58 = arith.constant dense<0.000000e+00> : vector<8x8xf32>
    %112 = tpu.matmul %108, %3, %cst_58 {dimension_numbers = #tpu.dot_dimension_numbers<[1], [0], [0], [1], [0, 0, 1, 1], [], []>} : vector<8x15xbf16>, vector<15x8xbf16>, vector<8x8xf32> -> vector<8x8xf32>
    %cst_59 = arith.constant dense<0.000000e+00> : vector<8x8xf32>
    %113 = tpu.matmul %111, %3, %cst_59 {dimension_numbers = #tpu.dot_dimension_numbers<[1], [0], [0], [1], [0, 0, 1, 1], [], []>} : vector<8x15xbf16>, vector<15x8xbf16>, vector<8x8xf32> -> vector<8x8xf32>
    %114 = arith.addf %112, %113 : vector<8x8xf32>
    %c3_60 = arith.constant 3 : index
    %c0_61 = arith.constant 0 : index
    %c0_62 = arith.constant 0 : index
    %115 = vector.load %arg6[%c3_60, %c0_61, %c0_62] : memref<4x8x8xf32, #tpu.memory_space<vmem>>, vector<1x8x8xf32>
    %116 = vector.shape_cast %115 : vector<1x8x8xf32> to vector<8x8xf32>
    %117 = vector.shape_cast %114 : vector<8x8xf32> to vector<1x8x8xf32>
    tpu.vector_store %arg6[%c3_60, %c0_61, %c0_62], %117 {strides = array<i32>} : memref<4x8x8xf32, #tpu.memory_space<vmem>>, vector<1x8x8xf32>,
    %cst_63 = arith.constant 0.000000e+00 : f32
    %118 = vector.broadcast %cst_63 : f32 to vector<8x8xf32>
    %119 = arith.cmpf oeq, %114, %118 : vector<8x8xf32>
    %c3_64 = arith.constant 3 : index
    %c0_65 = arith.constant 0 : index
    %c0_66 = arith.constant 0 : index
    %120 = vector.load %arg3[%c3_64, %c0_65, %c0_66] : memref<4x8x8xf32, #tpu.memory_space<vmem>>, vector<1x8x8xf32>
    %121 = vector.shape_cast %120 : vector<1x8x8xf32> to vector<8x8xf32>
    %122 = arith.subf %114, %121 : vector<8x8xf32>
    %cst_67 = arith.constant 0.000000e+00 : f32
    %123 = vector.broadcast %cst_67 : f32 to vector<8x8xf32>
    %124 = arith.select %119, %123, %122 : vector<8x8xi1>, vector<8x8xf32>
    %125 = arith.mulf %124, %124 : vector<8x8xf32>
    %c3_68 = arith.constant 3 : index
    %c0_69 = arith.constant 0 : index
    %c0_70 = arith.constant 0 : index
    %126 = vector.load %arg7[%c3_68, %c0_69, %c0_70] : memref<4x8x8xf32, #tpu.memory_space<vmem>>, vector<1x8x8xf32>
    %127 = vector.shape_cast %126 : vector<1x8x8xf32> to vector<8x8xf32>
    %128 = arith.addf %127, %125 : vector<8x8xf32>
    %c3_71 = arith.constant 3 : index
    %c0_72 = arith.constant 0 : index
    %c0_73 = arith.constant 0 : index
    %129 = vector.load %arg7[%c3_71, %c0_72, %c0_73] : memref<4x8x8xf32, #tpu.memory_space<vmem>>, vector<1x8x8xf32>
    %130 = vector.shape_cast %129 : vector<1x8x8xf32> to vector<8x8xf32>
    %131 = vector.shape_cast %128 : vector<8x8xf32> to vector<1x8x8xf32>
    tpu.vector_store %arg7[%c3_71, %c0_72, %c0_73], %131 {strides = array<i32>} : memref<4x8x8xf32, #tpu.memory_space<vmem>>, vector<1x8x8xf32>,
    %c0_i32_74 = arith.constant 0 : i32
    %132 = arith.cmpi eq, %arg1, %c0_i32_74 : i32
    %133 = arith.extui %132 : i1 to i32
    %c0_i32_75 = arith.constant 0 : i32
    %134 = arith.cmpi ne, %133, %c0_i32_75 : i32
    scf.if %134 {
      %c0_76 = arith.constant 0 : index
      %c0_77 = arith.constant 0 : index
      %c0_78 = arith.constant 0 : index
      %135 = vector.load %arg7[%c0_76, %c0_77, %c0_78] : memref<4x8x8xf32, #tpu.memory_space<vmem>>, vector<1x8x8xf32>
      %136 = vector.shape_cast %135 : vector<1x8x8xf32> to vector<8x8xf32>
      %cst_79 = arith.constant dense<0.000000e+00> : vector<8xf32>
      %137 = vector.multi_reduction <add>, %136, %cst_79 [0] : vector<8x8xf32> to vector<8xf32>
      %138 = vector.shape_cast %137 : vector<8xf32> to vector<1x8xf32>
      %139 = math.sqrt %138 : vector<1x8xf32>
      %140 = vector.shape_cast %139 : vector<1x8xf32> to vector<1x1x8xf32>
      %cst_80 = arith.constant dense<0.000000e+00> : vector<1xf32>
      %141 = vector.multi_reduction <add>, %140, %cst_80 [1, 2] : vector<1x1x8xf32> to vector<1xf32>
      %142 = vector.shape_cast %141 : vector<1xf32> to vector<1x1x1xf32>
      %143 = vector.extract %142[0, 0, 0] : f32 from vector<1x1x1xf32>
      %cst_81 = arith.constant 0.000000e+00 : f32
      %144 = arith.addf %cst_81, %143 : f32
      %c1_82 = arith.constant 1 : index
      %c0_83 = arith.constant 0 : index
      %c0_84 = arith.constant 0 : index
      %145 = vector.load %arg7[%c1_82, %c0_83, %c0_84] : memref<4x8x8xf32, #tpu.memory_space<vmem>>, vector<1x8x8xf32>
      %146 = vector.shape_cast %145 : vector<1x8x8xf32> to vector<8x8xf32>
      %cst_85 = arith.constant dense<0.000000e+00> : vector<8xf32>
      %147 = vector.multi_reduction <add>, %146, %cst_85 [0] : vector<8x8xf32> to vector<8xf32>
      %148 = vector.shape_cast %147 : vector<8xf32> to vector<1x8xf32>
      %149 = math.sqrt %148 : vector<1x8xf32>
      %150 = vector.shape_cast %149 : vector<1x8xf32> to vector<1x1x8xf32>
      %cst_86 = arith.constant dense<0.000000e+00> : vector<1xf32>
      %151 = vector.multi_reduction <add>, %150, %cst_86 [1, 2] : vector<1x1x8xf32> to vector<1xf32>
      %152 = vector.shape_cast %151 : vector<1xf32> to vector<1x1x1xf32>
      %153 = vector.extract %152[0, 0, 0] : f32 from vector<1x1x1xf32>
      %154 = arith.addf %144, %153 : f32
      %c2_87 = arith.constant 2 : index
      %c0_88 = arith.constant 0 : index
      %c0_89 = arith.constant 0 : index
      %155 = vector.load %arg7[%c2_87, %c0_88, %c0_89] : memref<4x8x8xf32, #tpu.memory_space<vmem>>, vector<1x8x8xf32>
      %156 = vector.shape_cast %155 : vector<1x8x8xf32> to vector<8x8xf32>
      %cst_90 = arith.constant dense<0.000000e+00> : vector<8xf32>
      %157 = vector.multi_reduction <add>, %156, %cst_90 [0] : vector<8x8xf32> to vector<8xf32>
      %158 = vector.shape_cast %157 : vector<8xf32> to vector<1x8xf32>
      %159 = math.sqrt %158 : vector<1x8xf32>
      %160 = vector.shape_cast %159 : vector<1x8xf32> to vector<1x1x8xf32>
      %cst_91 = arith.constant dense<0.000000e+00> : vector<1xf32>
      %161 = vector.multi_reduction <add>, %160, %cst_91 [1, 2] : vector<1x1x8xf32> to vector<1xf32>
      %162 = vector.shape_cast %161 : vector<1xf32> to vector<1x1x1xf32>
      %163 = vector.extract %162[0, 0, 0] : f32 from vector<1x1x1xf32>
      %164 = arith.addf %154, %163 : f32
      %c3_92 = arith.constant 3 : index
      %c0_93 = arith.constant 0 : index
      %c0_94 = arith.constant 0 : index
      %165 = vector.load %arg7[%c3_92, %c0_93, %c0_94] : memref<4x8x8xf32, #tpu.memory_space<vmem>>, vector<1x8x8xf32>
      %166 = vector.shape_cast %165 : vector<1x8x8xf32> to vector<8x8xf32>
      %cst_95 = arith.constant dense<0.000000e+00> : vector<8xf32>
      %167 = vector.multi_reduction <add>, %166, %cst_95 [0] : vector<8x8xf32> to vector<8xf32>
      %168 = vector.shape_cast %167 : vector<8xf32> to vector<1x8xf32>
      %169 = math.sqrt %168 : vector<1x8xf32>
      %170 = vector.shape_cast %169 : vector<1x8xf32> to vector<1x1x8xf32>
      %cst_96 = arith.constant dense<0.000000e+00> : vector<1xf32>
      %171 = vector.multi_reduction <add>, %170, %cst_96 [1, 2] : vector<1x1x8xf32> to vector<1xf32>
      %172 = vector.shape_cast %171 : vector<1xf32> to vector<1x1x1xf32>
      %173 = vector.extract %172[0, 0, 0] : f32 from vector<1x1x1xf32>
      %174 = arith.addf %164, %173 : f32
      %cst_97 = arith.constant 0.000000e+00 : f32
      %175 = vector.broadcast %cst_97 : f32 to vector<1x128xf32>
      %cst_98 = arith.constant 1.562500e-02 : f32
      %176 = arith.mulf %174, %cst_98 : f32
      %177 = vector.broadcast %176 : f32 to vector<1x128xf32>
      %178 = arith.addf %175, %177 : vector<1x128xf32>
      %c0_99 = arith.constant 0 : index
      %c0_100 = arith.constant 0 : index
      %c0_101 = arith.constant 0 : index
      %179 = vector.load %arg5[%c0_99, %c0_100, %c0_101] : memref<1x1x128xf32, #tpu.memory_space<vmem>>, vector<1x1x128xf32>
      %180 = vector.shape_cast %179 : vector<1x1x128xf32> to vector<1x128xf32>
      %181 = vector.shape_cast %178 : vector<1x128xf32> to vector<1x1x128xf32>
      tpu.vector_store %arg5[%c0_99, %c0_100, %c0_101], %181 {strides = array<i32>} : memref<1x1x128xf32, #tpu.memory_space<vmem>>, vector<1x1x128xf32>,
    } else {
    }
    return
  }
  func.func @transform_0(%arg0: i32, %arg1: i32) -> (i32, i32, i32) {
    %c0_i32 = arith.constant 0 : i32
    %c0_i32_0 = arith.constant 0 : i32
    return %arg0, %arg1, %c0_i32 : i32, i32, i32
  }
  func.func @transform_1(%arg0: i32, %arg1: i32) -> (i32, i32, i32) {
    %c0_i32 = arith.constant 0 : i32
    %c0_i32_0 = arith.constant 0 : i32
    return %arg0, %arg1, %c0_i32 : i32, i32, i32
  }
  func.func @transform_2(%arg0: i32, %arg1: i32) -> (i32, i32) {
    %c0_i32 = arith.constant 0 : i32
    %c0_i32_0 = arith.constant 0 : i32
    %c0_i32_1 = arith.constant 0 : i32
    return %c0_i32, %c0_i32_0 : i32, i32
  }
  func.func @transform_3(%arg0: i32, %arg1: i32) -> (i32, i32, i32) {
    %c0_i32 = arith.constant 0 : i32
    %c0_i32_0 = arith.constant 0 : i32
    %c0_i32_1 = arith.constant 0 : i32
    return %arg0, %c0_i32, %c0_i32_0 : i32, i32, i32
  }
  func.func @transform_4(%arg0: i32, %arg1: i32) -> (i32, i32, i32) {
    %c0_i32 = arith.constant 0 : i32
    %c0_i32_0 = arith.constant 0 : i32
    return %arg0, %arg1, %c0_i32 : i32, i32, i32
  }
}

</mosaic_0001>

<llo_original>
// kernel: tpu_custom_call.1
$region0: #{tpu_custom_call.1}
  #allocation0 [shape = 'u32[]', space=smem, size = 0x4, offset = 0x4, fixed_abs, tag = 'smem constant byte address 0x4 - core index']
  #allocation1 [shape = 'u32[144,128]{1,0:T(1,128)}', space=vmem, size = 0x12000, scoped, tag = 'internal scratch']
  #allocation2 [shape = 'f32[4,8,8]{2,1,0:T(8,128)}', space=vmem, size = 0x4000, scoped, tag = 'scratch operand']
  %s0 = inlined_call_operand.hbm [shape: f32[8,8,32], index: 0, kind: input, shape index: {}]
  %s1 = inlined_call_operand.hbm [shape: f32[8,8,8], index: 1, kind: input, shape index: {}]
  %s2 = inlined_call_operand.vmem [shape: bf16[15,8], index: 2, kind: input, shape index: {}]
  %s3 = inlined_call_operand.hbm [shape: f32[2,1,128], index: 3, kind: output, shape index: {0}]
  %s4 = inlined_call_operand.hbm [shape: f32[8,8,8], index: 4, kind: output, shape index: {1}]
  %5 = xla_tuple %s3, %s4
  %s6 = sld [smem:[#allocation0]]
  $region69: #{tpu_custom_call.1} parent=0
    _
  %s8 = ssub.s32 1, %s6
  %s9 = scalar_select 0, %s8, %s6
  $region1: #{tpu_custom_call.1} parent=0
    #allocation3 [shape = 'u8[32768]{0}', space=vmem, size = 0x8000, scoped, tag = 'input window, operand 0']
    #allocation4 [shape = 's32[2]{0}', space=sflag, size = 0x8, scoped, tag = 'scoped memory for tpu_custom_call.1']
    #allocation5 [shape = 's32[2]{0}', space=sflag, size = 0x8, scoped, tag = 'scoped memory for tpu_custom_call.1']
    #allocation6 [shape = 'u8[32768]{0}', space=vmem, size = 0x8000, scoped, tag = 'input window, operand 1']
    #allocation7 [shape = 's32[2]{0}', space=sflag, size = 0x8, scoped, tag = 'scoped memory for tpu_custom_call.1']
    #allocation8 [shape = 'u8[1024]{0}', space=vmem, size = 0x400, scoped, tag = 'output window, operand 0']
    #allocation9 [shape = 'u8[32768]{0}', space=vmem, size = 0x8000, scoped, tag = 'output window, operand 1']
    #allocation10 [shape = 's32[2]{0}', space=sflag, size = 0x8, scoped, tag = 'scoped memory for tpu_custom_call.1']
    %10 = vsyncpa [#allocation4], 0
    %s11 = scalar_lea.sflag [#allocation4], 1
    %12 = vsyncpa %s11, 0
    %13 = vsyncpa [#allocation7], 0
    %s14 = scalar_lea.sflag [#allocation7], 1
    %15 = vsyncpa %s14, 0
    %16 = vsyncpa [#allocation5], 0
    %s17 = scalar_lea.sflag [#allocation5], 1
    %18 = vsyncpa %s17, 0
    %19 = vsyncpa [#allocation10], 0
    %s20 = scalar_lea.sflag [#allocation10], 1
    %21 = vsyncpa %s20, 0
    loop: start=0, step=1, limit=4
    $region2: #{tpu_custom_call.1} parent=1 // loop_pre_header
      _
    $region3: #{tpu_custom_call.1} parent=1 // loop_header
      %s23 = sphi 0, %s27
      %p24 = scmp.ge.s32.totalorder %s23, 4
      %s30 = sphi 0, %s42
      %s31 = sphi 0, %s38
      %s32 = sphi 0, %s30
      %s33 = sphi 0, %s31
      %s34 = sphi 0, %s32
      %s35 = sphi 0, %s33
      %s47 = sphi 0, %s49
      %s50 = sphi 0, %s47
      %s51 = sphi 0, %s50
      %s67 = sphi 0, %s51
      %s75 = sphi 0, %s77
      %s78 = sphi 0, %s75
      %s79 = sphi 0, %s78
      %s95 = sphi 0, %s79
      %s99 = sphi 0, %s99
      %s101 = sphi 0, %s99
      %s102 = sphi 0, %s101
      %s116 = sphi 0, %s102
      %s122 = sphi 0, %s124
      %s125 = sphi 0, %s122
      %s126 = sphi 0, %s125
      %s142 = sphi 0, %s126
      %s150 = sphi 0, %s152
      %s153 = sphi 0, %s150
      %s154 = sphi 0, %s153
      %s170 = sphi 0, %s154
    $region4: #{tpu_custom_call.1} parent=1 // loop_header_branch
      %26 = sbr.rel (%p24) target = $region8
    $region5: #{tpu_custom_call.1} parent=1 // loop_body
      %s28 = ssub.s32 %s23, 1
      %s29 = ssub.s32 %s23, 2
      %s36 = sadd.s32 1, %s31
      %p37 = scmp.ge.s32.totalorder %s36, 1
      %s38 = scalar_select %p37, 0, %s36
      %s39 = sadd.s32 1, %s30
      %s40 = scalar_select %p37, %s39, %s30
      %p41 = scmp.ge.s32.totalorder %s40, 2
      %s42 = scalar_select %p41, 0, %s40
      %s43 = ssub.s32 %s30, %s42
      %s44 = ssub.s32 %s31, %s38
      %s45 = sor.u32 %s43, %s44
      %p46 = scmp.eq.s32.totalorder %s45, 0
      %s48 = sadd.s32 %s47, 1
      %s49 = scalar_select %p46, %s47, %s48
      %p52 = pneg %p46
      %p53 = scmp.eq.s32.totalorder %s23, 1
      %p54 = por %p52, %p53
      %p55 = scmp.ne.s32.totalorder %s47, %s50
      %p56 = scmp.eq.s32.totalorder %s23, 0
      %p57 = por %p55, %p56
      %p58 = scmp.ne.s32.totalorder %s47, %s50
      %p59 = scmp.eq.s32.totalorder %s28, 1
      %p60 = por %p58, %p59
      %p61 = scmp.ne.s32.totalorder %s50, %s51
      %p62 = scmp.eq.s32.totalorder %s28, 0
      %p63 = por %p61, %p62
      %p64 = scmp.ne.s32.totalorder %s50, %s51
      %p65 = scmp.eq.s32.totalorder %s29, 1
      %p66 = por %p64, %p65
      %p68 = scmp.ne.s32.totalorder %s51, %s67
      %p69 = scmp.eq.s32.totalorder %s29, 0
      %p70 = por %p68, %p69
      %s71 = ssub.s32 %s30, %s42
      %s72 = ssub.s32 %s31, %s38
      %s73 = sor.u32 %s71, %s72
      %p74 = scmp.eq.s32.totalorder %s73, 0
      %s76 = sadd.s32 %s75, 1
      %s77 = scalar_select %p74, %s75, %s76
      %p80 = pneg %p74
      %p81 = scmp.eq.s32.totalorder %s23, 1
      %p82 = por %p80, %p81
      %p83 = scmp.ne.s32.totalorder %s75, %s78
      %p84 = scmp.eq.s32.totalorder %s23, 0
      %p85 = por %p83, %p84
      %p86 = scmp.ne.s32.totalorder %s75, %s78
      %p87 = scmp.eq.s32.totalorder %s28, 1
      %p88 = por %p86, %p87
      %p89 = scmp.ne.s32.totalorder %s78, %s79
      %p90 = scmp.eq.s32.totalorder %s28, 0
      %p91 = por %p89, %p90
      %p92 = scmp.ne.s32.totalorder %s78, %s79
      %p93 = scmp.eq.s32.totalorder %s29, 1
      %p94 = por %p92, %p93
      %p96 = scmp.ne.s32.totalorder %s79, %s95
      %p97 = scmp.eq.s32.totalorder %s29, 0
      %p98 = por %p96, %p97
      %s100 = sadd.s32 %s99, 1
      %p103 = scmp.eq.s32.totalorder %s23, 1
      %p104 = scmp.ne.s32.totalorder %s99, %s101
      %p105 = scmp.eq.s32.totalorder %s23, 0
      %p106 = por %p104, %p105
      %p107 = scmp.ne.s32.totalorder %s99, %s101
      %p108 = scmp.eq.s32.totalorder %s28, 1
      %p109 = por %p107, %p108
      %p110 = scmp.ne.s32.totalorder %s101, %s102
      %p111 = scmp.eq.s32.totalorder %s28, 0
      %p112 = por %p110, %p111
      %p113 = scmp.ne.s32.totalorder %s101, %s102
      %p114 = scmp.eq.s32.totalorder %s29, 1
      %p115 = por %p113, %p114
      %p117 = scmp.ne.s32.totalorder %s102, %s116
      %p118 = scmp.eq.s32.totalorder %s29, 0
      %p119 = por %p117, %p118
      %s120 = ssub.s32 %s30, %s42
      %p121 = scmp.eq.s32.totalorder %s120, 0
      %s123 = sadd.s32 %s122, 1
      %s124 = scalar_select %p121, %s122, %s123
      %p127 = pneg %p121
      %p128 = scmp.eq.s32.totalorder %s23, 1
      %p129 = por %p127, %p128
      %p130 = scmp.ne.s32.totalorder %s122, %s125
      %p131 = scmp.eq.s32.totalorder %s23, 0
      %p132 = por %p130, %p131
      %p133 = scmp.ne.s32.totalorder %s122, %s125
      %p134 = scmp.eq.s32.totalorder %s28, 1
      %p135 = por %p133, %p134
      %p136 = scmp.ne.s32.totalorder %s125, %s126
      %p137 = scmp.eq.s32.totalorder %s28, 0
      %p138 = por %p136, %p137
      %p139 = scmp.ne.s32.totalorder %s125, %s126
      %p140 = scmp.eq.s32.totalorder %s29, 1
      %p141 = por %p139, %p140
      %p143 = scmp.ne.s32.totalorder %s126, %s142
      %p144 = scmp.eq.s32.totalorder %s29, 0
      %p145 = por %p143, %p144
      %s146 = ssub.s32 %s30, %s42
      %s147 = ssub.s32 %s31, %s38
      %s148 = sor.u32 %s146, %s147
      %p149 = scmp.eq.s32.totalorder %s148, 0
      %s151 = sadd.s32 %s150, 1
      %s152 = scalar_select %p149, %s150, %s151
      %p155 = pneg %p149
      %p156 = scmp.eq.s32.totalorder %s23, 1
      %p157 = por %p155, %p156
      %p158 = scmp.ne.s32.totalorder %s150, %s153
      %p159 = scmp.eq.s32.totalorder %s23, 0
      %p160 = por %p158, %p159
      %p161 = scmp.ne.s32.totalorder %s150, %s153
      %p162 = scmp.eq.s32.totalorder %s28, 1
      %p163 = por %p161, %p162
      %p164 = scmp.ne.s32.totalorder %s153, %s154
      %p165 = scmp.eq.s32.totalorder %s28, 0
      %p166 = por %p164, %p165
      %p167 = scmp.ne.s32.totalorder %s153, %s154
      %p168 = scmp.eq.s32.totalorder %s29, 1
      %p169 = por %p167, %p168
      %p171 = scmp.ne.s32.totalorder %s154, %s170
      %p172 = scmp.eq.s32.totalorder %s29, 0
      %p173 = por %p171, %p172
      %p174 = scmp.le.s32.totalorder 1, %s23
      %p175 = scmp.lt.s32.totalorder %s23, 3
      %p176 = pnand %p174, %p175
      %p177 = pneg %p176
      // Predicated region
      $region9: #{tpu_custom_call.1} parent=5 // pred_check
        _
      $region10: #{tpu_custom_call.1} parent=5 // pred_check_branch
        %179 = sbr.rel (%p176) target = $region12
      $region11: #{tpu_custom_call.1} parent=5 // pred_region
        %s180 = ssub.s32 %s23, 1
        // Predicated region
        $region13: #{tpu_custom_call.1} parent=11 // pred_check
          %p181 = pneg %p112
        $region14: #{tpu_custom_call.1} parent=11 // pred_check_branch
          %183 = sbr.rel (%p181) target = $region16
        $region15: #{tpu_custom_call.1} parent=11 // pred_region
          _
        $region16: #{tpu_custom_call.1} parent=11 // pred_fallthru
          _
      $region12: #{tpu_custom_call.1} parent=5 // pred_fallthru
        _
      %p184 = scmp.lt.s32.totalorder %s23, 2
      // Predicated region
      $region17: #{tpu_custom_call.1} parent=5 // pred_check
        %p185 = pneg %p184
      $region18: #{tpu_custom_call.1} parent=5 // pred_check_branch
        %187 = sbr.rel (%p185) target = $region20
      $region19: #{tpu_custom_call.1} parent=5 // pred_region
        // Predicated region
        $region21: #{tpu_custom_call.1} parent=19 // pred_check
          %p188 = pneg %p57
        $region22: #{tpu_custom_call.1} parent=19 // pred_check_branch
          %190 = sbr.rel (%p188) target = $region24
        $region23: #{tpu_custom_call.1} parent=19 // pred_region
          %s191 = sand.u32 %s47, 1
          %s192 = scalar_lea.sflag [#allocation4], %s191
          %s193 = sand.u32 %s47, 1
          %s194 = smul.addr %s193, 32
          %s195 = scalar_lea.vmem [#allocation3], %s194
          %s196 = smul.u32 4, %s30
          %s198 = ssub.s32 512, 512
          %199 = vsyncadd %s192, %s198
          %s200 = sadd.s32 %s31, %s196
          %s201 = smul.addr %s200, 128
          %s202 = scalar_lea.hbm %s0, %s201
          %s203 = sshll.u32 %s195, 4
          %s204 = int_to_ptr.vmem [resolvable:$true] %s203
          %209 = dma.hbm_to_vmem [thread:$0]  %s202, 512, %s204, %s192, 128, 128, 8
        $region24: #{tpu_custom_call.1} parent=19 // pred_fallthru
          _
        // Predicated region
        $region25: #{tpu_custom_call.1} parent=19 // pred_check
          %p210 = pneg %p85
        $region26: #{tpu_custom_call.1} parent=19 // pred_check_branch
          %212 = sbr.rel (%p210) target = $region28
        $region27: #{tpu_custom_call.1} parent=19 // pred_region
          %s213 = sand.u32 %s75, 1
          %s214 = scalar_lea.sflag [#allocation7], %s213
          %s215 = sand.u32 %s75, 1
          %s216 = smul.addr %s215, 32
          %s217 = scalar_lea.vmem [#allocation6], %s216
          %s218 = smul.u32 4, %s30
          %s220 = ssub.s32 512, 512
          %221 = vsyncadd %s214, %s220
          %s222 = sadd.s32 %s31, %s218
          %s223 = smul.addr %s222, 128
          %s224 = scalar_lea.hbm %s1, %s223
          %s225 = sshll.u32 %s217, 4
          %s226 = int_to_ptr.vmem [resolvable:$true] %s225
          %231 = dma.hbm_to_vmem [thread:$0]  %s224, 512, %s226, %s214, 128, 128, 8
        $region28: #{tpu_custom_call.1} parent=19 // pred_fallthru
          _
      $region20: #{tpu_custom_call.1} parent=5 // pred_fallthru
        _
      %p232 = scmp.le.s32.totalorder 1, %s23
      %p233 = scmp.lt.s32.totalorder %s23, 3
      %p234 = pnand %p232, %p233
      %p235 = pneg %p234
      // Predicated region
      $region29: #{tpu_custom_call.1} parent=5 // pred_check
        _
      $region30: #{tpu_custom_call.1} parent=5 // pred_check_branch
        %237 = sbr.rel (%p234) target = $region32
      $region31: #{tpu_custom_call.1} parent=5 // pred_region
        %s238 = ssub.s32 %s23, 1
        %s239 = sand.u32 %s50, 1
        %s240 = scalar_lea.sflag [#allocation4], %s239
        %s241 = sand.u32 %s50, 1
        %s242 = smul.addr %s241, 32
        %s243 = scalar_lea.vmem [#allocation3], %s242
        // Predicated region
        $region33: #{tpu_custom_call.1} parent=31 // pred_check
          %p244 = pneg %p63
        $region34: #{tpu_custom_call.1} parent=31 // pred_check_branch
          %246 = sbr.rel (%p244) target = $region36
        $region35: #{tpu_custom_call.1} parent=31 // pred_region
          %247 = dma.done %s240, 512
        $region36: #{tpu_custom_call.1} parent=31 // pred_fallthru
          _
        %s248 = sand.u32 %s78, 1
        %s249 = scalar_lea.sflag [#allocation7], %s248
        %s250 = sand.u32 %s78, 1
        %s251 = smul.addr %s250, 32
        %s252 = scalar_lea.vmem [#allocation6], %s251
        // Predicated region
        $region37: #{tpu_custom_call.1} parent=31 // pred_check
          %p253 = pneg %p91
        $region38: #{tpu_custom_call.1} parent=31 // pred_check_branch
          %255 = sbr.rel (%p253) target = $region40
        $region39: #{tpu_custom_call.1} parent=31 // pred_region
          %256 = dma.done %s249, 512
        $region40: #{tpu_custom_call.1} parent=31 // pred_fallthru
          _
        %s257 = sand.u32 %s50, 1
        %s258 = scalar_lea.sflag [#allocation4], %s257
        %s259 = sand.u32 %s50, 1
        %s260 = smul.addr %s259, 32
        %s261 = scalar_lea.vmem [#allocation3], %s260
        %p262 = pneg %p63
        %p263 = pneg %p60
        %s264 = sand.u32 %s78, 1
        %s265 = scalar_lea.sflag [#allocation7], %s264
        %s266 = sand.u32 %s78, 1
        %s267 = smul.addr %s266, 32
        %s268 = scalar_lea.vmem [#allocation6], %s267
        %p269 = pneg %p91
        %p270 = pneg %p88
        %p271 = pneg %p112
        %p272 = pneg %p109
        %p273 = pneg %p138
        %p274 = pneg %p135
        %s275 = sand.u32 %s125, 1
        %s276 = scalar_lea.sflag [#allocation5], %s275
        %s277 = sand.u32 %s125, 1
        %s278 = scalar_lea.vmem [#allocation8], %s277
        %p279 = pneg %p166
        %p280 = pneg %p163
        %s281 = sand.u32 %s153, 1
        %s282 = scalar_lea.sflag [#allocation10], %s281
        %s283 = sand.u32 %s153, 1
        %s284 = smul.addr %s283, 32
        %s285 = scalar_lea.vmem [#allocation9], %s284
        %s286 = smul.u32 4, %s32
        %s287 = smul.u32 4, %s32
        %s288 = smul.u32 4, %s32
        %p290 = scmp.eq.s32.totalorder %s33, 0
        // Predicated region
        $region41: #{tpu_custom_call.1} parent=31 // pred_check
          %p291 = pneg %p290
        $region42: #{tpu_custom_call.1} parent=31 // pred_check_branch
          %293 = sbr.rel (%p291) target = $region44
        $region43: #{tpu_custom_call.1} parent=31 // pred_region
          %vm294 = vcmask 64512
          %295 = vst.msk [vmem:[#allocation2] sm:$0xff] %vm294, 0.0
          %296 = vst.msk [vmem:[#allocation2 + $0x8] sm:$0xff] %vm294, 0.0
          %297 = vst.msk [vmem:[#allocation2 + $0x10] sm:$0xff] %vm294, 0.0
          %298 = vst.msk [vmem:[#allocation2 + $0x18] sm:$0xff] %vm294, 0.0
        $region44: #{tpu_custom_call.1} parent=31 // pred_fallthru
          _
        %v299 = vld [vmem:[%s2] sm:$0xf]
        %v300 = vld [vmem:[%s2 + $0x4] sm:$0xf]
        %v301 = vld [vmem:[%s243] sm:$0xff]
        %303 = vrot.lane.b32.xlu0 %v301, 112
        %v304 = vpop.permute.xlu0 %303
        %v306 = vmax.f32 %v301, %v304
        %308 = vrot.lane.b32.xlu0 %v306, 127
        %v309 = vpop.permute.xlu0 %308
        %v311 = vmax.f32 %v306, %v309
        %v312 = vpack.c.bf16 %v311, %v311
        %v313 = vunpack.c.l.bf16 %v312
        %v314 = vsub.f32 %v311, %v313
        %v315 = vpack.c.bf16 %v314, %v314
        %v318 = vunpack.c.l.b16 %v299
        %v319 = vunpack.c.l.b16 %v300
        %v320 = vpack.c.b16 %v319, %v318
        %vm321 = vcmask 121856
        %v323 = vsel %vm321, %v315, 0
        %vm325 = vcmask 1046528
        %vm326 = vcmask 1047552
        %v327 = vsel %vm325, 4294967295, 65535
        %v328 = vsel %vm326, %v327, 0
        %v330 = vand.u32 %v320, %v328
        %332 = vmatprep.subr.bf16.mxu0 0
        %333 = vmatpush1.bf16.msra.mxu0 %v330
        %334 = vmatprep.subr.bf16.mxu0 0
        %335 = vmatpush1.bf16.msra.mxu0 0
        %336 = vmatprep.subr.bf16.mxu0 0
        %337 = vmatpush1.bf16.msra.mxu0 0
        %338 = vmatprep.subr.bf16.mxu0 0
        %339 = vmatpush1.bf16.msra.mxu0 0
        %340 = vmatprep.subr.bf16.mxu0 0
        %341 = vmatpush1.bf16.msra.mxu0 0
        %342 = vmatprep.subr.bf16.mxu0 0
        %343 = vmatpush1.bf16.msra.mxu0 0
        %344 = vmatprep.subr.bf16.mxu0 0
        %345 = vmatpush1.bf16.msra.mxu0 0
        %346 = vmatprep.subr.bf16.mxu0 0
        %347 = vmatpush1.bf16.msra.mxu0 0
        %348 = vmatprep.subr.bf16.mxu0 0
        %349 = vmatpush1.bf16.msra.mxu0 0
        %350 = vmatprep.subr.bf16.mxu0 0
        %351 = vmatpush1.bf16.msra.mxu0 0
        %352 = vmatprep.subr.bf16.mxu0 0
        %353 = vmatpush1.bf16.msra.mxu0 0
        %354 = vmatprep.subr.bf16.mxu0 0
        %355 = vmatpush1.bf16.msra.mxu0 0
        %356 = vmatprep.subr.bf16.mxu0 0
        %357 = vmatpush1.bf16.msra.mxu0 0
        %358 = vmatprep.subr.bf16.mxu0 0
        %359 = vmatpush1.bf16.msra.mxu0 0
        %360 = vmatprep.subr.bf16.mxu0 0
        %361 = vmatpush1.bf16.msra.mxu0 0
        %362 = vmatprep.subr.bf16.mxu0 0
        %363 = vmatpush1.bf16.msra.mxu0 0
        %364 = vmatprep.mubr.bf16.mxu0 0
        %365 = vmatmul.mubr.bf16.gmra.mrb[0].mxu0 %v323
        %v366 = vpop.f32.mrb[0].mxu0
        %v367 = vadd.f32 0.0, %v366
        %v368 = vpop.f32.mrb[0].mxu0
        %v369 = vpop.f32.mrb[0].mxu0
        %v370 = vpop.f32.mrb[0].mxu0
        %371 = vdwg.mxu0
        %v373 = vsel %vm321, %v312, 0
        %375 = vmatprep.subr.bf16.mxu0 0
        %376 = vmatpush1.bf16.msra.mxu0 %v330
        %377 = vmatprep.subr.bf16.mxu0 0
        %378 = vmatpush1.bf16.msra.mxu0 0
        %379 = vmatprep.subr.bf16.mxu0 0
        %380 = vmatpush1.bf16.msra.mxu0 0
        %381 = vmatprep.subr.bf16.mxu0 0
        %382 = vmatpush1.bf16.msra.mxu0 0
        %383 = vmatprep.subr.bf16.mxu0 0
        %384 = vmatpush1.bf16.msra.mxu0 0
        %385 = vmatprep.subr.bf16.mxu0 0
        %386 = vmatpush1.bf16.msra.mxu0 0
        %387 = vmatprep.subr.bf16.mxu0 0
        %388 = vmatpush1.bf16.msra.mxu0 0
        %389 = vmatprep.subr.bf16.mxu0 0
        %390 = vmatpush1.bf16.msra.mxu0 0
        %391 = vmatprep.subr.bf16.mxu0 0
        %392 = vmatpush1.bf16.msra.mxu0 0
        %393 = vmatprep.subr.bf16.mxu0 0
        %394 = vmatpush1.bf16.msra.mxu0 0
        %395 = vmatprep.subr.bf16.mxu0 0
        %396 = vmatpush1.bf16.msra.mxu0 0
        %397 = vmatprep.subr.bf16.mxu0 0
        %398 = vmatpush1.bf16.msra.mxu0 0
        %399 = vmatprep.subr.bf16.mxu0 0
        %400 = vmatpush1.bf16.msra.mxu0 0
        %401 = vmatprep.subr.bf16.mxu0 0
        %402 = vmatpush1.bf16.msra.mxu0 0
        %403 = vmatprep.subr.bf16.mxu0 0
        %404 = vmatpush1.bf16.msra.mxu0 0
        %405 = vmatprep.subr.bf16.mxu0 0
        %406 = vmatpush1.bf16.msra.mxu0 0
        %407 = vmatprep.mubr.bf16.mxu0 0
        %408 = vmatmul.mubr.bf16.gmra.mrb[0].mxu0 %v373
        %v409 = vpop.f32.mrb[0].mxu0
        %v410 = vadd.f32 %v367, %v409
        %v411 = vpop.f32.mrb[0].mxu0
        %v412 = vpop.f32.mrb[0].mxu0
        %v413 = vpop.f32.mrb[0].mxu0
        %414 = vdwg.mxu0
        %vm415 = vcmask 64512
        %416 = vst.msk [vmem:[%s285] sm:$0xff] %vm415, %v410
        %vm417 = vcmp.eq.f32.partialorder %v410, 0.0
        %v418 = vld [vmem:[%s252] sm:$0xff]
        %v419 = vsub.f32 %v410, %v418
        %v420 = vsel %vm417, 0.0, %v419
        %v421 = vmul.f32 %v420, %v420
        %v422 = vld [vmem:[#allocation2] sm:$0xff]
        %v423 = vadd.f32 %v422, %v421
        %424 = vst.msk [vmem:[#allocation2] sm:$0xff] %vm415, %v423
        %s425 = scalar_lea.vmem %s243, 8 [#allocation3]
        %v426 = vld [vmem:[%s425] sm:$0xff]
        %428 = vrot.lane.b32.xlu0 %v426, 112
        %v429 = vpop.permute.xlu0 %428
        %v431 = vmax.f32 %v426, %v429
        %433 = vrot.lane.b32.xlu0 %v431, 127
        %v434 = vpop.permute.xlu0 %433
        %v436 = vmax.f32 %v431, %v434
        %v437 = vpack.c.bf16 %v436, %v436
        %v438 = vunpack.c.l.bf16 %v437
        %v439 = vsub.f32 %v436, %v438
        %v440 = vpack.c.bf16 %v439, %v439
        %v442 = vsel %vm321, %v440, 0
        %444 = vmatprep.subr.bf16.mxu0 0
        %445 = vmatpush1.bf16.msra.mxu0 %v330
        %446 = vmatprep.subr.bf16.mxu0 0
        %447 = vmatpush1.bf16.msra.mxu0 0
        %448 = vmatprep.subr.bf16.mxu0 0
        %449 = vmatpush1.bf16.msra.mxu0 0
        %450 = vmatprep.subr.bf16.mxu0 0
        %451 = vmatpush1.bf16.msra.mxu0 0
        %452 = vmatprep.subr.bf16.mxu0 0
        %453 = vmatpush1.bf16.msra.mxu0 0
        %454 = vmatprep.subr.bf16.mxu0 0
        %455 = vmatpush1.bf16.msra.mxu0 0
        %456 = vmatprep.subr.bf16.mxu0 0
        %457 = vmatpush1.bf16.msra.mxu0 0
        %458 = vmatprep.subr.bf16.mxu0 0
        %459 = vmatpush1.bf16.msra.mxu0 0
        %460 = vmatprep.subr.bf16.mxu0 0
        %461 = vmatpush1.bf16.msra.mxu0 0
        %462 = vmatprep.subr.bf16.mxu0 0
        %463 = vmatpush1.bf16.msra.mxu0 0
        %464 = vmatprep.subr.bf16.mxu0 0
        %465 = vmatpush1.bf16.msra.mxu0 0
        %466 = vmatprep.subr.bf16.mxu0 0
        %467 = vmatpush1.bf16.msra.mxu0 0
        %468 = vmatprep.subr.bf16.mxu0 0
        %469 = vmatpush1.bf16.msra.mxu0 0
        %470 = vmatprep.subr.bf16.mxu0 0
        %471 = vmatpush1.bf16.msra.mxu0 0
        %472 = vmatprep.subr.bf16.mxu0 0
        %473 = vmatpush1.bf16.msra.mxu0 0
        %474 = vmatprep.subr.bf16.mxu0 0
        %475 = vmatpush1.bf16.msra.mxu0 0
        %476 = vmatprep.mubr.bf16.mxu0 0
        %477 = vmatmul.mubr.bf16.gmra.mrb[0].mxu0 %v442
        %v478 = vpop.f32.mrb[0].mxu0
        %v479 = vadd.f32 0.0, %v478
        %v480 = vpop.f32.mrb[0].mxu0
        %v481 = vpop.f32.mrb[0].mxu0
        %v482 = vpop.f32.mrb[0].mxu0
        %483 = vdwg.mxu0
        %v485 = vsel %vm321, %v437, 0
        %487 = vmatprep.subr.bf16.mxu0 0
        %488 = vmatpush1.bf16.msra.mxu0 %v330
        %489 = vmatprep.subr.bf16.mxu0 0
        %490 = vmatpush1.bf16.msra.mxu0 0
        %491 = vmatprep.subr.bf16.mxu0 0
        %492 = vmatpush1.bf16.msra.mxu0 0
        %493 = vmatprep.subr.bf16.mxu0 0
        %494 = vmatpush1.bf16.msra.mxu0 0
        %495 = vmatprep.subr.bf16.mxu0 0
        %496 = vmatpush1.bf16.msra.mxu0 0
        %497 = vmatprep.subr.bf16.mxu0 0
        %498 = vmatpush1.bf16.msra.mxu0 0
        %499 = vmatprep.subr.bf16.mxu0 0
        %500 = vmatpush1.bf16.msra.mxu0 0
        %501 = vmatprep.subr.bf16.mxu0 0
        %502 = vmatpush1.bf16.msra.mxu0 0
        %503 = vmatprep.subr.bf16.mxu0 0
        %504 = vmatpush1.bf16.msra.mxu0 0
        %505 = vmatprep.subr.bf16.mxu0 0
        %506 = vmatpush1.bf16.msra.mxu0 0
        %507 = vmatprep.subr.bf16.mxu0 0
        %508 = vmatpush1.bf16.msra.mxu0 0
        %509 = vmatprep.subr.bf16.mxu0 0
        %510 = vmatpush1.bf16.msra.mxu0 0
        %511 = vmatprep.subr.bf16.mxu0 0
        %512 = vmatpush1.bf16.msra.mxu0 0
        %513 = vmatprep.subr.bf16.mxu0 0
        %514 = vmatpush1.bf16.msra.mxu0 0
        %515 = vmatprep.subr.bf16.mxu0 0
        %516 = vmatpush1.bf16.msra.mxu0 0
        %517 = vmatprep.subr.bf16.mxu0 0
        %518 = vmatpush1.bf16.msra.mxu0 0
        %519 = vmatprep.mubr.bf16.mxu0 0
        %520 = vmatmul.mubr.bf16.gmra.mrb[0].mxu0 %v485
        %v521 = vpop.f32.mrb[0].mxu0
        %v522 = vadd.f32 %v479, %v521
        %v523 = vpop.f32.mrb[0].mxu0
        %v524 = vpop.f32.mrb[0].mxu0
        %v525 = vpop.f32.mrb[0].mxu0
        %526 = vdwg.mxu0
        %s527 = scalar_lea.vmem %s285, 8 [#allocation9]
        %528 = vst.msk [vmem:[%s527] sm:$0xff] %vm415, %v522
        %vm529 = vcmp.eq.f32.partialorder %v522, 0.0
        %s530 = scalar_lea.vmem %s252, 8 [#allocation6]
        %v531 = vld [vmem:[%s530] sm:$0xff]
        %v532 = vsub.f32 %v522, %v531
        %v533 = vsel %vm529, 0.0, %v532
        %v534 = vmul.f32 %v533, %v533
        %s535 = scalar_lea.vmem [#allocation2], 8
        %v536 = vld [vmem:[%s535] sm:$0xff]
        %v537 = vadd.f32 %v536, %v534
        %538 = vst.msk [vmem:[%s535] sm:$0xff] %vm415, %v537
        %s539 = scalar_lea.vmem %s243, 16 [#allocation3]
        %v540 = vld [vmem:[%s539] sm:$0xff]
        %542 = vrot.lane.b32.xlu0 %v540, 112
        %v543 = vpop.permute.xlu0 %542
        %v545 = vmax.f32 %v540, %v543
        %547 = vrot.lane.b32.xlu0 %v545, 127
        %v548 = vpop.permute.xlu0 %547
        %v550 = vmax.f32 %v545, %v548
        %v551 = vpack.c.bf16 %v550, %v550
        %v552 = vunpack.c.l.bf16 %v551
        %v553 = vsub.f32 %v550, %v552
        %v554 = vpack.c.bf16 %v553, %v553
        %v556 = vsel %vm321, %v554, 0
        %558 = vmatprep.subr.bf16.mxu0 0
        %559 = vmatpush1.bf16.msra.mxu0 %v330
        %560 = vmatprep.subr.bf16.mxu0 0
        %561 = vmatpush1.bf16.msra.mxu0 0
        %562 = vmatprep.subr.bf16.mxu0 0
        %563 = vmatpush1.bf16.msra.mxu0 0
        %564 = vmatprep.subr.bf16.mxu0 0
        %565 = vmatpush1.bf16.msra.mxu0 0
        %566 = vmatprep.subr.bf16.mxu0 0
        %567 = vmatpush1.bf16.msra.mxu0 0
        %568 = vmatprep.subr.bf16.mxu0 0
        %569 = vmatpush1.bf16.msra.mxu0 0
        %570 = vmatprep.subr.bf16.mxu0 0
        %571 = vmatpush1.bf16.msra.mxu0 0
        %572 = vmatprep.subr.bf16.mxu0 0
        %573 = vmatpush1.bf16.msra.mxu0 0
        %574 = vmatprep.subr.bf16.mxu0 0
        %575 = vmatpush1.bf16.msra.mxu0 0
        %576 = vmatprep.subr.bf16.mxu0 0
        %577 = vmatpush1.bf16.msra.mxu0 0
        %578 = vmatprep.subr.bf16.mxu0 0
        %579 = vmatpush1.bf16.msra.mxu0 0
        %580 = vmatprep.subr.bf16.mxu0 0
        %581 = vmatpush1.bf16.msra.mxu0 0
        %582 = vmatprep.subr.bf16.mxu0 0
        %583 = vmatpush1.bf16.msra.mxu0 0
        %584 = vmatprep.subr.bf16.mxu0 0
        %585 = vmatpush1.bf16.msra.mxu0 0
        %586 = vmatprep.subr.bf16.mxu0 0
        %587 = vmatpush1.bf16.msra.mxu0 0
        %588 = vmatprep.subr.bf16.mxu0 0
        %589 = vmatpush1.bf16.msra.mxu0 0
        %590 = vmatprep.mubr.bf16.mxu0 0
        %591 = vmatmul.mubr.bf16.gmra.mrb[0].mxu0 %v556
        %v592 = vpop.f32.mrb[0].mxu0
        %v593 = vadd.f32 0.0, %v592
        %v594 = vpop.f32.mrb[0].mxu0
        %v595 = vpop.f32.mrb[0].mxu0
        %v596 = vpop.f32.mrb[0].mxu0
        %597 = vdwg.mxu0
        %v599 = vsel %vm321, %v551, 0
        %601 = vmatprep.subr.bf16.mxu0 0
        %602 = vmatpush1.bf16.msra.mxu0 %v330
        %603 = vmatprep.subr.bf16.mxu0 0
        %604 = vmatpush1.bf16.msra.mxu0 0
        %605 = vmatprep.subr.bf16.mxu0 0
        %606 = vmatpush1.bf16.msra.mxu0 0
        %607 = vmatprep.subr.bf16.mxu0 0
        %608 = vmatpush1.bf16.msra.mxu0 0
        %609 = vmatprep.subr.bf16.mxu0 0
        %610 = vmatpush1.bf16.msra.mxu0 0
        %611 = vmatprep.subr.bf16.mxu0 0
        %612 = vmatpush1.bf16.msra.mxu0 0
        %613 = vmatprep.subr.bf16.mxu0 0
        %614 = vmatpush1.bf16.msra.mxu0 0
        %615 = vmatprep.subr.bf16.mxu0 0
        %616 = vmatpush1.bf16.msra.mxu0 0
        %617 = vmatprep.subr.bf16.mxu0 0
        %618 = vmatpush1.bf16.msra.mxu0 0
        %619 = vmatprep.subr.bf16.mxu0 0
        %620 = vmatpush1.bf16.msra.mxu0 0
        %621 = vmatprep.subr.bf16.mxu0 0
        %622 = vmatpush1.bf16.msra.mxu0 0
        %623 = vmatprep.subr.bf16.mxu0 0
        %624 = vmatpush1.bf16.msra.mxu0 0
        %625 = vmatprep.subr.bf16.mxu0 0
        %626 = vmatpush1.bf16.msra.mxu0 0
        %627 = vmatprep.subr.bf16.mxu0 0
        %628 = vmatpush1.bf16.msra.mxu0 0
        %629 = vmatprep.subr.bf16.mxu0 0
        %630 = vmatpush1.bf16.msra.mxu0 0
        %631 = vmatprep.subr.bf16.mxu0 0
        %632 = vmatpush1.bf16.msra.mxu0 0
        %633 = vmatprep.mubr.bf16.mxu0 0
        %634 = vmatmul.mubr.bf16.gmra.mrb[0].mxu0 %v599
        %v635 = vpop.f32.mrb[0].mxu0
        %v636 = vadd.f32 %v593, %v635
        %v637 = vpop.f32.mrb[0].mxu0
        %v638 = vpop.f32.mrb[0].mxu0
        %v639 = vpop.f32.mrb[0].mxu0
        %640 = vdwg.mxu0
        %s641 = scalar_lea.vmem %s285, 16 [#allocation9]
        %642 = vst.msk [vmem:[%s641] sm:$0xff] %vm415, %v636
        %vm643 = vcmp.eq.f32.partialorder %v636, 0.0
        %s644 = scalar_lea.vmem %s252, 16 [#allocation6]
        %v645 = vld [vmem:[%s644] sm:$0xff]
        %v646 = vsub.f32 %v636, %v645
        %v647 = vsel %vm643, 0.0, %v646
        %v648 = vmul.f32 %v647, %v647
        %s649 = scalar_lea.vmem [#allocation2], 16
        %v650 = vld [vmem:[%s649] sm:$0xff]
        %v651 = vadd.f32 %v650, %v648
        %652 = vst.msk [vmem:[%s649] sm:$0xff] %vm415, %v651
        %s653 = scalar_lea.vmem %s243, 24 [#allocation3]
        %v654 = vld [vmem:[%s653] sm:$0xff]
        %656 = vrot.lane.b32.xlu0 %v654, 112
        %v657 = vpop.permute.xlu0 %656
        %v659 = vmax.f32 %v654, %v657
        %661 = vrot.lane.b32.xlu0 %v659, 127
        %v662 = vpop.permute.xlu0 %661
        %v664 = vmax.f32 %v659, %v662
        %v665 = vpack.c.bf16 %v664, %v664
        %v666 = vunpack.c.l.bf16 %v665
        %v667 = vsub.f32 %v664, %v666
        %v668 = vpack.c.bf16 %v667, %v667
        %v670 = vsel %vm321, %v668, 0
        %672 = vmatprep.subr.bf16.mxu0 0
        %673 = vmatpush1.bf16.msra.mxu0 %v330
        %674 = vmatprep.subr.bf16.mxu0 0
        %675 = vmatpush1.bf16.msra.mxu0 0
        %676 = vmatprep.subr.bf16.mxu0 0
        %677 = vmatpush1.bf16.msra.mxu0 0
        %678 = vmatprep.subr.bf16.mxu0 0
        %679 = vmatpush1.bf16.msra.mxu0 0
        %680 = vmatprep.subr.bf16.mxu0 0
        %681 = vmatpush1.bf16.msra.mxu0 0
        %682 = vmatprep.subr.bf16.mxu0 0
        %683 = vmatpush1.bf16.msra.mxu0 0
        %684 = vmatprep.subr.bf16.mxu0 0
        %685 = vmatpush1.bf16.msra.mxu0 0
        %686 = vmatprep.subr.bf16.mxu0 0
        %687 = vmatpush1.bf16.msra.mxu0 0
        %688 = vmatprep.subr.bf16.mxu0 0
        %689 = vmatpush1.bf16.msra.mxu0 0
        %690 = vmatprep.subr.bf16.mxu0 0
        %691 = vmatpush1.bf16.msra.mxu0 0
        %692 = vmatprep.subr.bf16.mxu0 0
        %693 = vmatpush1.bf16.msra.mxu0 0
        %694 = vmatprep.subr.bf16.mxu0 0
        %695 = vmatpush1.bf16.msra.mxu0 0
        %696 = vmatprep.subr.bf16.mxu0 0
        %697 = vmatpush1.bf16.msra.mxu0 0
        %698 = vmatprep.subr.bf16.mxu0 0
        %699 = vmatpush1.bf16.msra.mxu0 0
        %700 = vmatprep.subr.bf16.mxu0 0
        %701 = vmatpush1.bf16.msra.mxu0 0
        %702 = vmatprep.subr.bf16.mxu0 0
        %703 = vmatpush1.bf16.msra.mxu0 0
        %704 = vmatprep.mubr.bf16.mxu0 0
        %705 = vmatmul.mubr.bf16.gmra.mrb[0].mxu0 %v670
        %v706 = vpop.f32.mrb[0].mxu0
        %v707 = vadd.f32 0.0, %v706
        %v708 = vpop.f32.mrb[0].mxu0
        %v709 = vpop.f32.mrb[0].mxu0
        %v710 = vpop.f32.mrb[0].mxu0
        %711 = vdwg.mxu0
        %v713 = vsel %vm321, %v665, 0
        %715 = vmatprep.subr.bf16.mxu0 0
        %716 = vmatpush1.bf16.msra.mxu0 %v330
        %717 = vmatprep.subr.bf16.mxu0 0
        %718 = vmatpush1.bf16.msra.mxu0 0
        %719 = vmatprep.subr.bf16.mxu0 0
        %720 = vmatpush1.bf16.msra.mxu0 0
        %721 = vmatprep.subr.bf16.mxu0 0
        %722 = vmatpush1.bf16.msra.mxu0 0
        %723 = vmatprep.subr.bf16.mxu0 0
        %724 = vmatpush1.bf16.msra.mxu0 0
        %725 = vmatprep.subr.bf16.mxu0 0
        %726 = vmatpush1.bf16.msra.mxu0 0
        %727 = vmatprep.subr.bf16.mxu0 0
        %728 = vmatpush1.bf16.msra.mxu0 0
        %729 = vmatprep.subr.bf16.mxu0 0
        %730 = vmatpush1.bf16.msra.mxu0 0
        %731 = vmatprep.subr.bf16.mxu0 0
        %732 = vmatpush1.bf16.msra.mxu0 0
        %733 = vmatprep.subr.bf16.mxu0 0
        %734 = vmatpush1.bf16.msra.mxu0 0
        %735 = vmatprep.subr.bf16.mxu0 0
        %736 = vmatpush1.bf16.msra.mxu0 0
        %737 = vmatprep.subr.bf16.mxu0 0
        %738 = vmatpush1.bf16.msra.mxu0 0
        %739 = vmatprep.subr.bf16.mxu0 0
        %740 = vmatpush1.bf16.msra.mxu0 0
        %741 = vmatprep.subr.bf16.mxu0 0
        %742 = vmatpush1.bf16.msra.mxu0 0
        %743 = vmatprep.subr.bf16.mxu0 0
        %744 = vmatpush1.bf16.msra.mxu0 0
        %745 = vmatprep.subr.bf16.mxu0 0
        %746 = vmatpush1.bf16.msra.mxu0 0
        %747 = vmatprep.mubr.bf16.mxu0 0
        %748 = vmatmul.mubr.bf16.gmra.mrb[0].mxu0 %v713
        %v749 = vpop.f32.mrb[0].mxu0
        %v750 = vadd.f32 %v707, %v749
        %v751 = vpop.f32.mrb[0].mxu0
        %v752 = vpop.f32.mrb[0].mxu0
        %v753 = vpop.f32.mrb[0].mxu0
        %754 = vdwg.mxu0
        %s755 = scalar_lea.vmem %s285, 24 [#allocation9]
        %756 = vst.msk [vmem:[%s755] sm:$0xff] %vm415, %v750
        %vm757 = vcmp.eq.f32.partialorder %v750, 0.0
        %s758 = scalar_lea.vmem %s252, 24 [#allocation6]
        %v759 = vld [vmem:[%s758] sm:$0xff]
        %v760 = vsub.f32 %v750, %v759
        %v761 = vsel %vm757, 0.0, %v760
        %v762 = vmul.f32 %v761, %v761
        %s763 = scalar_lea.vmem [#allocation2], 24
        %v764 = vld [vmem:[%s763] sm:$0xff]
        %v765 = vadd.f32 %v764, %v762
        %766 = vst.msk [vmem:[%s763] sm:$0xff] %vm415, %v765
        // Predicated region
        $region45: #{tpu_custom_call.1} parent=31 // pred_check
          %p767 = pneg %p290
        $region46: #{tpu_custom_call.1} parent=31 // pred_check_branch
          %769 = sbr.rel (%p767) target = $region48
        $region47: #{tpu_custom_call.1} parent=31 // pred_region
          %v770 = vld [vmem:[#allocation2] sm:$0xff]
          %v771 = vsel %vm415, %v770, 0.0
          %v772 = vrot.slane %v771, 4
          %v773 = vadd.f32 %v771, %v772
          %v774 = vrot.slane %v773, 2
          %v775 = vadd.f32 %v773, %v774
          %v776 = vrot.slane %v775, 1
          %v777 = vadd.f32 %v775, %v776
          %v778 = vrsqrt.pop %v777
          %v779 = vmul.f32 %v777, %v778
          %vm780 = vcmp.eq.f32.partialorder %v777, inf
          %v781 = vsel %vm780, %v777, %v779
          %vm782 = vcmp.eq.f32.partialorder %v777, 0.0
          %v783 = vand.u32 %v777, 2147483648
          %v784 = vsel %vm782, %v783, %v781
          %vm785 = vcmask 57344
          %v786 = vsel %vm785, %v784, 0.0
          %787 = vadd.xlane.f32.xlu0 %v786
          %v788 = vpop.xlane.xlu0 %787
          %v789 = vrot.slane %v788, 4
          %v790 = vadd.f32 %v788, %v789
          %v791 = vrot.slane %v790, 2
          %v792 = vadd.f32 %v790, %v791
          %v793 = vrot.slane %v792, 1
          %v794 = vadd.f32 %v792, %v793
          %s795 = vtos %v794
          %s796 = sadd.f32 %s795, 0.0
          %v797 = vld [vmem:[%s535] sm:$0xff]
          %v798 = vsel %vm415, %v797, 0.0
          %v799 = vrot.slane %v798, 4
          %v800 = vadd.f32 %v798, %v799
          %v801 = vrot.slane %v800, 2
          %v802 = vadd.f32 %v800, %v801
          %v803 = vrot.slane %v802, 1
          %v804 = vadd.f32 %v802, %v803
          %v805 = vrsqrt.pop %v804
          %v806 = vmul.f32 %v804, %v805
          %vm807 = vcmp.eq.f32.partialorder %v804, inf
          %v808 = vsel %vm807, %v804, %v806
          %vm809 = vcmp.eq.f32.partialorder %v804, 0.0
          %v810 = vand.u32 %v804, 2147483648
          %v811 = vsel %vm809, %v810, %v808
          %v812 = vsel %vm785, %v811, 0.0
          %813 = vadd.xlane.f32.xlu0 %v812
          %v814 = vpop.xlane.xlu0 %813
          %v815 = vrot.slane %v814, 4
          %v816 = vadd.f32 %v814, %v815
          %v817 = vrot.slane %v816, 2
          %v818 = vadd.f32 %v816, %v817
          %v819 = vrot.slane %v818, 1
          %v820 = vadd.f32 %v818, %v819
          %s821 = vtos %v820
          %s822 = sadd.f32 %s796, %s821
          %v823 = vld [vmem:[%s649] sm:$0xff]
          %v824 = vsel %vm415, %v823, 0.0
          %v825 = vrot.slane %v824, 4
          %v826 = vadd.f32 %v824, %v825
          %v827 = vrot.slane %v826, 2
          %v828 = vadd.f32 %v826, %v827
          %v829 = vrot.slane %v828, 1
          %v830 = vadd.f32 %v828, %v829
          %v831 = vrsqrt.pop %v830
          %v832 = vmul.f32 %v830, %v831
          %vm833 = vcmp.eq.f32.partialorder %v830, inf
          %v834 = vsel %vm833, %v830, %v832
          %vm835 = vcmp.eq.f32.partialorder %v830, 0.0
          %v836 = vand.u32 %v830, 2147483648
          %v837 = vsel %vm835, %v836, %v834
          %v838 = vsel %vm785, %v837, 0.0
          %839 = vadd.xlane.f32.xlu0 %v838
          %v840 = vpop.xlane.xlu0 %839
          %v841 = vrot.slane %v840, 4
          %v842 = vadd.f32 %v840, %v841
          %v843 = vrot.slane %v842, 2
          %v844 = vadd.f32 %v842, %v843
          %v845 = vrot.slane %v844, 1
          %v846 = vadd.f32 %v844, %v845
          %s847 = vtos %v846
          %s848 = sadd.f32 %s822, %s847
          %v849 = vld [vmem:[%s763] sm:$0xff]
          %v850 = vsel %vm415, %v849, 0.0
          %v851 = vrot.slane %v850, 4
          %v852 = vadd.f32 %v850, %v851
          %v853 = vrot.slane %v852, 2
          %v854 = vadd.f32 %v852, %v853
          %v855 = vrot.slane %v854, 1
          %v856 = vadd.f32 %v854, %v855
          %v857 = vrsqrt.pop %v856
          %v858 = vmul.f32 %v856, %v857
          %vm859 = vcmp.eq.f32.partialorder %v856, inf
          %v860 = vsel %vm859, %v856, %v858
          %vm861 = vcmp.eq.f32.partialorder %v856, 0.0
          %v862 = vand.u32 %v856, 2147483648
          %v863 = vsel %vm861, %v862, %v860
          %v864 = vsel %vm785, %v863, 0.0
          %865 = vadd.xlane.f32.xlu0 %v864
          %v866 = vpop.xlane.xlu0 %865
          %v867 = vrot.slane %v866, 4
          %v868 = vadd.f32 %v866, %v867
          %v869 = vrot.slane %v868, 2
          %v870 = vadd.f32 %v868, %v869
          %v871 = vrot.slane %v870, 1
          %v872 = vadd.f32 %v870, %v871
          %s873 = vtos %v872
          %s874 = sadd.f32 %s848, %s873
          %s875 = smul.f32 %s874, 0.015625
          %v876 = vstv %s875
          %v877 = vadd.f32 %v876, 0.0
          %878 = vst [vmem:[%s278] sm:$0x1] %v877
        $region48: #{tpu_custom_call.1} parent=31 // pred_fallthru
          _
        %s879 = sand.u32 %s125, 1
        %s880 = scalar_lea.sflag [#allocation5], %s879
        %s881 = sand.u32 %s125, 1
        %s882 = scalar_lea.vmem [#allocation8], %s881
        %s883 = sand.u32 %s153, 1
        %s884 = scalar_lea.sflag [#allocation10], %s883
        %s885 = sand.u32 %s153, 1
        %s886 = smul.addr %s885, 32
        %s887 = scalar_lea.vmem [#allocation9], %s886
        // Predicated region
        $region49: #{tpu_custom_call.1} parent=31 // pred_check
          %p888 = pneg %p135
        $region50: #{tpu_custom_call.1} parent=31 // pred_check_branch
          %890 = sbr.rel (%p888) target = $region52
        $region51: #{tpu_custom_call.1} parent=31 // pred_region
          %s892 = ssub.s32 16, 16
          %893 = vsyncadd %s880, %s892
          %s894 = smul.addr %s32, 16
          %s895 = scalar_lea.hbm %s3, %s894
          %s897 = sshll.u32 %s882, 4
          %s898 = int_to_ptr.vmem [resolvable:$true] %s897
          %900 = dma.vmem_to_hbm [thread:$0]  %s898, 16, %s895, %s880
        $region52: #{tpu_custom_call.1} parent=31 // pred_fallthru
          _
        // Predicated region
        $region53: #{tpu_custom_call.1} parent=31 // pred_check
          %p901 = pneg %p163
        $region54: #{tpu_custom_call.1} parent=31 // pred_check_branch
          %903 = sbr.rel (%p901) target = $region56
        $region55: #{tpu_custom_call.1} parent=31 // pred_region
          %s904 = smul.u32 4, %s32
          %s906 = ssub.s32 512, 512
          %907 = vsyncadd %s884, %s906
          %s908 = sadd.s32 %s33, %s904
          %s909 = smul.addr %s908, 128
          %s910 = scalar_lea.hbm %s4, %s909
          %s911 = sshll.u32 %s887, 4
          %s912 = int_to_ptr.vmem [resolvable:$true] %s911
          %917 = dma.vmem_to_hbm [thread:$0]  %s912, 512, %s910, %s884, 128, 128, 8
        $region56: #{tpu_custom_call.1} parent=31 // pred_fallthru
          _
      $region32: #{tpu_custom_call.1} parent=5 // pred_fallthru
        _
      %p918 = scmp.le.s32.totalorder 2, %s23
      // Predicated region
      $region57: #{tpu_custom_call.1} parent=5 // pred_check
        %p919 = pneg %p918
      $region58: #{tpu_custom_call.1} parent=5 // pred_check_branch
        %921 = sbr.rel (%p919) target = $region60
      $region59: #{tpu_custom_call.1} parent=5 // pred_region
        %s922 = ssub.s32 %s23, 2
        // Predicated region
        $region61: #{tpu_custom_call.1} parent=59 // pred_check
          %p923 = pneg %p141
        $region62: #{tpu_custom_call.1} parent=59 // pred_check_branch
          %925 = sbr.rel (%p923) target = $region64
        $region63: #{tpu_custom_call.1} parent=59 // pred_region
          %s926 = sand.u32 %s126, 1
          %s927 = scalar_lea.sflag [#allocation5], %s926
          %s928 = sand.u32 %s126, 1
          %s929 = scalar_lea.vmem [#allocation8], %s928
          %930 = dma.done %s927, 16
        $region64: #{tpu_custom_call.1} parent=59 // pred_fallthru
          _
        // Predicated region
        $region65: #{tpu_custom_call.1} parent=59 // pred_check
          %p931 = pneg %p169
        $region66: #{tpu_custom_call.1} parent=59 // pred_check_branch
          %933 = sbr.rel (%p931) target = $region68
        $region67: #{tpu_custom_call.1} parent=59 // pred_region
          %s934 = sand.u32 %s154, 1
          %s935 = scalar_lea.sflag [#allocation10], %s934
          %s936 = sand.u32 %s154, 1
          %s937 = smul.addr %s936, 32
          %s938 = scalar_lea.vmem [#allocation9], %s937
          %939 = dma.done %s935, 512
        $region68: #{tpu_custom_call.1} parent=59 // pred_fallthru
          _
      $region60: #{tpu_custom_call.1} parent=5 // pred_fallthru
        _
    $region6: #{tpu_custom_call.1} parent=1 // loop_footer
      %s27 = sadd.s32 1, %s23
    $region7: #{tpu_custom_call.1} parent=1 // loop_footer_branch
      %22 = sbr.rel target = $region3
    $region8: #{tpu_custom_call.1} parent=1 // loop_exit
      _
    %940 = vsyncpa [#allocation4], 1
    %s941 = scalar_lea.sflag [#allocation4], 1
    %942 = vsyncpa %s941, 1
    %943 = vsyncpa [#allocation7], 1
    %s944 = scalar_lea.sflag [#allocation7], 1
    %945 = vsyncpa %s944, 1
    %946 = vsyncpa [#allocation5], 1
    %s947 = scalar_lea.sflag [#allocation5], 1
    %948 = vsyncpa %s947, 1
    %949 = vsyncpa [#allocation10], 1
    %s950 = scalar_lea.sflag [#allocation10], 1
    %951 = vsyncpa %s950, 1

</llo_original>
